<compile_context>
chip_gen: v7x
topology: tpu7x:2x2x1
jax: 0.10.0
libtpu: 0.0.40
codegen_flags: <defaults>
</compile_context>

<pallas_src>
import functools

import jax
import jax.numpy as jnp
from jax.experimental import pallas as pl
from jax.experimental.pallas import tpu as pltpu


def _mha_kernel(x_ref, wx_ref, bx_ref, wp_ref, bp_ref, o_ref, y_ref, ctx_ref,
                *, n_heads, df_pad, tq):
    # x_ref:  (T, Dm)  bf16   one batch element (batch dim squeezed), full sequence
    # wx_ref: (Dm, Dp) bf16   stacked per-head x_tfm weights (in->out, lane-aligned heads)
    # bx_ref: (1, Dp)  f32    stacked per-head biases (zero in padded lanes)
    # wp_ref: (Dp, Dm) bf16   projection weight (in->out, rows matching padded ctx layout)
    # bp_ref: (1, Dm)  f32    projection bias
    # o_ref:  (tq, Dm)        output tile (query rows of this grid step)
    # y_ref:  (T, Dp)  f32    persistent scratch: all heads' features, full sequence
    # ctx_ref:(tq, Dp) f32    scratch slab: per-head contexts written into their columns
    q = pl.program_id(1)

    @pl.when(q == 0)
    def _():
        # Fused per-head linear for the whole sequence (keys), one big bf16 MXU pass,
        # f32 accumulation, carried in VMEM scratch across the q axis.
        y_ref[...] = (
            jnp.dot(x_ref[...], wx_ref[...], preferred_element_type=jnp.float32)
            + bx_ref[...]
        )

    y = y_ref[...]                                     # (T, Dp) f32: keys, all heads
    q_start = pl.multiple_of(q * tq, tq)
    yq = y_ref[pl.ds(q_start, tq), :]                  # (tq, Dp) f32: this query tile

    for h in range(n_heads):                           # static unroll (n_heads is small)
        lo = h * df_pad                                # 128-lane aligned head slice
        yh = y[:, lo:lo + df_pad]                      # (T,  dfp) keys
        yqh = yq[:, lo:lo + df_pad]                    # (tq, dfp) queries
        # Cosine similarity == dot product of L2-normalized rows (rsqrt on the EUP).
        kn = yh * jax.lax.rsqrt(jnp.sum(yh * yh, axis=1, keepdims=True))
        qn = yqh * jax.lax.rsqrt(jnp.sum(yqh * yqh, axis=1, keepdims=True))
        scores = jax.lax.dot_general(
            qn.astype(jnp.bfloat16), kn.astype(jnp.bfloat16),
            (((1,), (1,)), ((), ())),
            preferred_element_type=jnp.float32)        # (tq, T)
        # Softmax over keys (exact: full key axis resident); reciprocal on the EUP slot.
        m = jnp.max(scores, axis=-1, keepdims=True)
        e = jnp.exp(scores - m)
        p = e * pl.reciprocal(jnp.sum(e, axis=-1, keepdims=True), approx=True)
        # Write this head's context straight into its columns of the slab.
        ctx_ref[:, lo:lo + df_pad] = jnp.dot(
            p.astype(jnp.bfloat16), yh.astype(jnp.bfloat16),
            preferred_element_type=jnp.float32)        # (tq, dfp)

    # Final projection, fused into the same kernel; zero-padded wp rows make the
    # padded ctx lanes exactly neutral.
    out = jnp.dot(ctx_ref[...].astype(jnp.bfloat16), wp_ref[...],
                  preferred_element_type=jnp.float32) + bp_ref[...]
    o_ref[...] = out.astype(o_ref.dtype)


def multi_head_attention_pallas(x, w_heads, b_heads, w_proj, b_proj, *, tq=None):
    """Pallas implementation of MultiHeadAttention.forward (eval mode).

    x:       (B, T, d_model) float32
    w_heads: (n_heads, d_feature, d_model)  -- per-head x_tfm.weight (torch (out, in))
    b_heads: (n_heads, d_feature)           -- per-head x_tfm.bias
    w_proj:  (d_model, d_model)             -- projection.weight (torch (out, in))
    b_proj:  (d_model,)                     -- projection.bias
    returns: (B, T, d_model)
    """
    B, T, Dm = x.shape
    H, df, Dm_in = w_heads.shape
    assert Dm_in == Dm and Dm == H * df

    # ---- query tile: must divide T; multiple of 8 for sublane alignment when < T.
    if tq is None:
        tq = T
        for cand in (256, 128, 512, 64, 32, 16, 8):
            if T % cand == 0:
                tq = cand
                break
    assert T % tq == 0
    nq = T // tq

    # ---- lane-align each head's feature block (pad df up to a multiple of 128).
    dfp = df if df % 128 == 0 else ((df + 127) // 128) * 128
    Dp = H * dfp

    w_dtype = jnp.bfloat16  # MXU operands in bf16; accumulation stays f32 in-kernel.

    # Stacked per-head x_tfm weights, (in -> out); head h in columns [h*dfp, h*dfp+df).
    wxh = jnp.transpose(w_heads, (2, 0, 1))                              # (Dm, H, df)
    wx = jnp.zeros((Dm, H, dfp), w_dtype).at[:, :, :df].set(wxh.astype(w_dtype))
    wx = wx.reshape(Dm, Dp)
    bx = jnp.zeros((H, dfp), jnp.float32).at[:, :df].set(
        b_heads.astype(jnp.float32)).reshape(1, Dp)

    # Projection (in -> out), rows re-spread to the padded ctx layout (zeros elsewhere).
    wpT = jnp.transpose(w_proj).reshape(H, df, Dm)                       # (H, df, Dm)
    wp = jnp.zeros((H, dfp, Dm), w_dtype).at[:, :df, :].set(wpT.astype(w_dtype))
    wp = wp.reshape(Dp, Dm)
    bp = b_proj.reshape(1, Dm).astype(jnp.float32)

    x_in = x.astype(w_dtype)

    # ---- explicit VMEM budget (feedback): tiles + weights + scratch + headroom.
    f32b, bf16b = 4, 2
    budget = (
        2 * T * Dm * bf16b                      # x block, double buffered
        + 2 * tq * Dm * f32b                    # output block, double buffered
        + 2 * (Dm * Dp + Dp * Dm) * bf16b       # weights (conservative: 2 buffers)
        + 2 * (Dp + Dm) * f32b                  # biases
        + T * Dp * f32b + tq * Dp * f32b        # y scratch + ctx slab
        + 4 * tq * T * f32b                     # softmax temporaries per head
    )
    vmem_limit = int(min(max(budget * 3 // 2 + (2 << 20), 8 << 20), 64 << 20))

    kernel = functools.partial(_mha_kernel, n_heads=H, df_pad=dfp, tq=tq)
    out_shape = jax.ShapeDtypeStruct((B, T, Dm), x.dtype)

    def build(single_buffer_weights):
        def const_spec(shape):
            # Constant index_map -> fetched once; Buffered(1) drops the wasted 2nd buffer.
            kwargs = {}
            if single_buffer_weights:
                kwargs["pipeline_mode"] = pl.Buffered(1)
            return pl.BlockSpec(shape, lambda b, qi: (0,) * len(shape), **kwargs)

        grid_spec = pltpu.PrefetchScalarGridSpec(
            num_scalar_prefetch=0,
            grid=(B, nq),
            in_specs=[
                pl.BlockSpec((None, T, Dm), lambda b, qi: (b, 0, 0)),   # x[b] (full seq)
                const_spec((Dm, Dp)),                                   # stacked head W
                const_spec((1, Dp)),                                    # stacked head b
                const_spec((Dp, Dm)),                                   # projection W
                const_spec((1, Dm)),                                    # projection b
            ],
            out_specs=pl.BlockSpec((None, tq, Dm), lambda b, qi: (b, qi, 0)),
            scratch_shapes=[
                pltpu.VMEM((T, Dp), jnp.float32),    # y: all heads' features, full seq
                pltpu.VMEM((tq, Dp), jnp.float32),   # ctx slab for the current q tile
            ],
        )
        return pl.pallas_call(
            kernel,
            out_shape=out_shape,
            grid_spec=grid_spec,
            compiler_params=pltpu.CompilerParams(
                dimension_semantics=("parallel", "arbitrary"),
                vmem_limit_bytes=vmem_limit,
            ),
        )

    try:
        out = build(True)(x_in, wx, bx, wp, bp)
        return jax.block_until_ready(out)
    except Exception:
        # Fallback for jax versions without BlockSpec(pipeline_mode=pl.Buffered(1));
        # identical semantics, weights simply stay double buffered.
        return build(False)(x_in, wx, bx, wp, bp)


def multi_head_attention_reference(x, w_heads, b_heads, w_proj, b_proj):
    """Pure-JAX mirror of the PyTorch forward pass (eval mode, f32)."""
    outs = []
    for h in range(w_heads.shape[0]):
        y = jnp.einsum("btd,fd->btf", x, w_heads[h]) + b_heads[h]
        norm = jnp.sqrt(jnp.sum(y * y, axis=2, keepdims=True))
        scores = jnp.einsum("btf,bsf->bts", y, y) / (norm * jnp.swapaxes(norm, 1, 2))
        p = jax.nn.softmax(scores, axis=-1)
        outs.append(jnp.einsum("bts,bsf->btf", p, y))
    cat = jnp.concatenate(outs, axis=2)
    return jnp.einsum("btf,of->bto", cat, w_proj) + b_proj


if __name__ == "__main__":
    # Small shapes consistent with the module: d_model = d_feature * n_heads.
    B, T = 2, 8
    d_model, n_heads = 32, 2
    d_feature = d_model // n_heads

    key = jax.random.PRNGKey(0)
    kx, kw, kb, kwp, kbp = jax.random.split(key, 5)

    x = jax.random.normal(kx, (B, T, d_model), dtype=jnp.float32)
    w_heads = 0.1 * jax.random.normal(kw, (n_heads, d_feature, d_model), jnp.float32)
    b_heads = 0.1 * jax.random.normal(kb, (n_heads, d_feature), jnp.float32)
    w_proj = 0.1 * jax.random.normal(kwp, (d_model, d_model), jnp.float32)
    b_proj = 0.1 * jax.random.normal(kbp, (d_model,), jnp.float32)

    out = multi_head_attention_pallas(x, w_heads, b_heads, w_proj, b_proj)
    out = jax.block_until_ready(out)

    ref = multi_head_attention_reference(x, w_heads, b_heads, w_proj, b_proj)
    assert out.shape == (B, T, d_model)
    # Tolerance covers bf16 MXU operands (f32 accumulation) and the approx (EUP) softmax
    # reciprocal; the f32 reference is the ground truth.
    err = float(jnp.max(jnp.abs(out - ref)))
    assert jnp.allclose(out, ref, atol=2e-2, rtol=2e-2), err

    print("KERNEL_OK")
</pallas_src>

<mosaic_0001>
module attributes {stable_mosaic.version = 11 : i64} {
  func.func @_mha_kernel(%arg0: i32, %arg1: i32, %arg2: memref<1x8x32xbf16, #tpu.memory_space<vmem>>, %arg3: memref<32x256xbf16, #tpu.memory_space<vmem>>, %arg4: memref<1x256xf32, #tpu.memory_space<vmem>>, %arg5: memref<256x32xbf16, #tpu.memory_space<vmem>>, %arg6: memref<1x32xf32, #tpu.memory_space<vmem>>, %arg7: memref<1x8x32xf32, #tpu.memory_space<vmem>>, %arg8: memref<8x256xf32, #tpu.memory_space<vmem>>, %arg9: memref<8x256xf32, #tpu.memory_space<vmem>>) attributes {dimension_semantics = [#tpu.dimension_semantics<parallel>, #tpu.dimension_semantics<arbitrary>], iteration_bounds = array<i64: 2, 1>, scalar_prefetch = 0 : i64, scratch_operands = 2 : i64, tpu.core_type = #tpu.core_type<tc>, window_params = [{transform_indices = @transform_0, window_bounds = array<i64: 1, 8, 32>}, {pipeline_mode = #tpu.pipeline_mode<synchronous>, transform_indices = @transform_1, window_bounds = array<i64: 32, 256>}, {pipeline_mode = #tpu.pipeline_mode<synchronous>, transform_indices = @transform_2, window_bounds = array<i64: 1, 256>}, {pipeline_mode = #tpu.pipeline_mode<synchronous>, transform_indices = @transform_3, window_bounds = array<i64: 256, 32>}, {pipeline_mode = #tpu.pipeline_mode<synchronous>, transform_indices = @transform_4, window_bounds = array<i64: 1, 32>}, {transform_indices = @transform_5, window_bounds = array<i64: 1, 8, 32>}]} {
    %c0_i32 = arith.constant 0 : i32
    %0 = arith.cmpi eq, %arg1, %c0_i32 : i32
    %1 = arith.extui %0 : i1 to i32
    %c0_i32_0 = arith.constant 0 : i32
    %2 = arith.cmpi ne, %1, %c0_i32_0 : i32
    scf.if %2 {
      %c0_27 = arith.constant 0 : index
      %c0_28 = arith.constant 0 : index
      %c0_29 = arith.constant 0 : index
      %80 = vector.load %arg2[%c0_27, %c0_28, %c0_29] : memref<1x8x32xbf16, #tpu.memory_space<vmem>>, vector<1x8x32xbf16>
      %81 = vector.shape_cast %80 : vector<1x8x32xbf16> to vector<8x32xbf16>
      %c0_30 = arith.constant 0 : index
      %c0_31 = arith.constant 0 : index
      %82 = vector.load %arg3[%c0_30, %c0_31] : memref<32x256xbf16, #tpu.memory_space<vmem>>, vector<32x256xbf16>
      %cst_32 = arith.constant dense<0.000000e+00> : vector<8x256xf32>
      %83 = tpu.matmul %81, %82, %cst_32 {dimension_numbers = #tpu.dot_dimension_numbers<[1], [0], [0], [1], [0, 0, 1, 1], [], []>} : vector<8x32xbf16>, vector<32x256xbf16>, vector<8x256xf32> -> vector<8x256xf32>
      %c0_33 = arith.constant 0 : index
      %c0_34 = arith.constant 0 : index
      %84 = vector.load %arg4[%c0_33, %c0_34] : memref<1x256xf32, #tpu.memory_space<vmem>>, vector<1x256xf32>
      %85 = vector.broadcast %84 : vector<1x256xf32> to vector<8x256xf32>
      %86 = arith.addf %83, %85 : vector<8x256xf32>
      %c0_35 = arith.constant 0 : index
      %c0_36 = arith.constant 0 : index
      %87 = vector.load %arg8[%c0_35, %c0_36] : memref<8x256xf32, #tpu.memory_space<vmem>>, vector<8x256xf32>
      tpu.vector_store %arg8[%c0_35, %c0_36], %86 {strides = array<i32>} : memref<8x256xf32, #tpu.memory_space<vmem>>, vector<8x256xf32>,
    } else {
    }
    %c0 = arith.constant 0 : index
    %c0_1 = arith.constant 0 : index
    %3 = vector.load %arg8[%c0, %c0_1] : memref<8x256xf32, #tpu.memory_space<vmem>>, vector<8x256xf32>
    %c8_i32 = arith.constant 8 : i32
    %4 = arith.muli %arg1, %c8_i32 : i32
    %5 = tpu.assume_multiple %4, 8 : i32
    %6 = arith.index_cast %5 : i32 to index
    %c0_2 = arith.constant 0 : index
    %7 = vector.load %arg8[%6, %c0_2] : memref<8x256xf32, #tpu.memory_space<vmem>>, vector<8x256xf32>
    %8 = vector.extract_strided_slice %3 {offsets = [0, 0], sizes = [8, 128], strides = [1, 1]} : vector<8x256xf32> to vector<8x128xf32>
    %9 = vector.extract_strided_slice %7 {offsets = [0, 0], sizes = [8, 128], strides = [1, 1]} : vector<8x256xf32> to vector<8x128xf32>
    %10 = arith.mulf %8, %8 : vector<8x128xf32>
    %cst = arith.constant dense<0.000000e+00> : vector<8xf32>
    %11 = vector.multi_reduction <add>, %10, %cst [1] : vector<8x128xf32> to vector<8xf32>
    %12 = vector.shape_cast %11 : vector<8xf32> to vector<8x1xf32>
    %13 = math.rsqrt %12 : vector<8x1xf32>
    %14 = vector.broadcast %13 : vector<8x1xf32> to vector<8x128xf32>
    %15 = arith.mulf %8, %14 : vector<8x128xf32>
    %16 = arith.mulf %9, %9 : vector<8x128xf32>
    %cst_3 = arith.constant dense<0.000000e+00> : vector<8xf32>
    %17 = vector.multi_reduction <add>, %16, %cst_3 [1] : vector<8x128xf32> to vector<8xf32>
    %18 = vector.shape_cast %17 : vector<8xf32> to vector<8x1xf32>
    %19 = math.rsqrt %18 : vector<8x1xf32>
    %20 = vector.broadcast %19 : vector<8x1xf32> to vector<8x128xf32>
    %21 = arith.mulf %9, %20 : vector<8x128xf32>
    %22 = arith.truncf %21 : vector<8x128xf32> to vector<8x128xbf16>
    %23 = arith.truncf %15 : vector<8x128xf32> to vector<8x128xbf16>
    %cst_4 = arith.constant dense<0.000000e+00> : vector<8x8xf32>
    %24 = tpu.matmul %22, %23, %cst_4 {dimension_numbers = #tpu.dot_dimension_numbers<[1], [1], [0], [0], [0, 0, 1, 0], [], []>} : vector<8x128xbf16>, vector<8x128xbf16>, vector<8x8xf32> -> vector<8x8xf32>
    %cst_5 = arith.constant dense<0xFF800000> : vector<8xf32>
    %25 = vector.multi_reduction <maximumf>, %24, %cst_5 [1] : vector<8x8xf32> to vector<8xf32>
    %26 = vector.shape_cast %25 : vector<8xf32> to vector<8x1xf32>
    %27 = vector.broadcast %26 : vector<8x1xf32> to vector<8x8xf32>
    %28 = arith.subf %24, %27 : vector<8x8xf32>
    %29 = math.exp %28 : vector<8x8xf32>
    %cst_6 = arith.constant dense<0.000000e+00> : vector<8xf32>
    %30 = vector.multi_reduction <add>, %29, %cst_6 [1] : vector<8x8xf32> to vector<8xf32>
    %31 = vector.shape_cast %30 : vector<8xf32> to vector<8x1xf32>
    %32 = tpu.reciprocal %31 {approx = true} : vector<8x1xf32> -> vector<8x1xf32>
    %33 = vector.broadcast %32 : vector<8x1xf32> to vector<8x8xf32>
    %34 = arith.mulf %29, %33 : vector<8x8xf32>
    %35 = arith.truncf %34 : vector<8x8xf32> to vector<8x8xbf16>
    %36 = arith.truncf %8 : vector<8x128xf32> to vector<8x128xbf16>
    %cst_7 = arith.constant dense<0.000000e+00> : vector<8x128xf32>
    %37 = tpu.matmul %35, %36, %cst_7 {dimension_numbers = #tpu.dot_dimension_numbers<[1], [0], [0], [1], [0, 0, 1, 1], [], []>} : vector<8x8xbf16>, vector<8x128xbf16>, vector<8x128xf32> -> vector<8x128xf32>
    %c0_8 = arith.constant 0 : index
    %c0_9 = arith.constant 0 : index
    %38 = vector.load %arg9[%c0_8, %c0_9] : memref<8x256xf32, #tpu.memory_space<vmem>>, vector<8x128xf32>
    tpu.vector_store %arg9[%c0_8, %c0_9], %37 {strides = array<i32>} : memref<8x256xf32, #tpu.memory_space<vmem>>, vector<8x128xf32>,
    %39 = vector.extract_strided_slice %3 {offsets = [0, 128], sizes = [8, 128], strides = [1, 1]} : vector<8x256xf32> to vector<8x128xf32>
    %40 = vector.extract_strided_slice %7 {offsets = [0, 128], sizes = [8, 128], strides = [1, 1]} : vector<8x256xf32> to vector<8x128xf32>
    %41 = arith.mulf %39, %39 : vector<8x128xf32>
    %cst_10 = arith.constant dense<0.000000e+00> : vector<8xf32>
    %42 = vector.multi_reduction <add>, %41, %cst_10 [1] : vector<8x128xf32> to vector<8xf32>
    %43 = vector.shape_cast %42 : vector<8xf32> to vector<8x1xf32>
    %44 = math.rsqrt %43 : vector<8x1xf32>
    %45 = vector.broadcast %44 : vector<8x1xf32> to vector<8x128xf32>
    %46 = arith.mulf %39, %45 : vector<8x128xf32>
    %47 = arith.mulf %40, %40 : vector<8x128xf32>
    %cst_11 = arith.constant dense<0.000000e+00> : vector<8xf32>
    %48 = vector.multi_reduction <add>, %47, %cst_11 [1] : vector<8x128xf32> to vector<8xf32>
    %49 = vector.shape_cast %48 : vector<8xf32> to vector<8x1xf32>
    %50 = math.rsqrt %49 : vector<8x1xf32>
    %51 = vector.broadcast %50 : vector<8x1xf32> to vector<8x128xf32>
    %52 = arith.mulf %40, %51 : vector<8x128xf32>
    %53 = arith.truncf %52 : vector<8x128xf32> to vector<8x128xbf16>
    %54 = arith.truncf %46 : vector<8x128xf32> to vector<8x128xbf16>
    %cst_12 = arith.constant dense<0.000000e+00> : vector<8x8xf32>
    %55 = tpu.matmul %53, %54, %cst_12 {dimension_numbers = #tpu.dot_dimension_numbers<[1], [1], [0], [0], [0, 0, 1, 0], [], []>} : vector<8x128xbf16>, vector<8x128xbf16>, vector<8x8xf32> -> vector<8x8xf32>
    %cst_13 = arith.constant dense<0xFF800000> : vector<8xf32>
    %56 = vector.multi_reduction <maximumf>, %55, %cst_13 [1] : vector<8x8xf32> to vector<8xf32>
    %57 = vector.shape_cast %56 : vector<8xf32> to vector<8x1xf32>
    %58 = vector.broadcast %57 : vector<8x1xf32> to vector<8x8xf32>
    %59 = arith.subf %55, %58 : vector<8x8xf32>
    %60 = math.exp %59 : vector<8x8xf32>
    %cst_14 = arith.constant dense<0.000000e+00> : vector<8xf32>
    %61 = vector.multi_reduction <add>, %60, %cst_14 [1] : vector<8x8xf32> to vector<8xf32>
    %62 = vector.shape_cast %61 : vector<8xf32> to vector<8x1xf32>
    %63 = tpu.reciprocal %62 {approx = true} : vector<8x1xf32> -> vector<8x1xf32>
    %64 = vector.broadcast %63 : vector<8x1xf32> to vector<8x8xf32>
    %65 = arith.mulf %60, %64 : vector<8x8xf32>
    %66 = arith.truncf %65 : vector<8x8xf32> to vector<8x8xbf16>
    %67 = arith.truncf %39 : vector<8x128xf32> to vector<8x128xbf16>
    %cst_15 = arith.constant dense<0.000000e+00> : vector<8x128xf32>
    %68 = tpu.matmul %66, %67, %cst_15 {dimension_numbers = #tpu.dot_dimension_numbers<[1], [0], [0], [1], [0, 0, 1, 1], [], []>} : vector<8x8xbf16>, vector<8x128xbf16>, vector<8x128xf32> -> vector<8x128xf32>
    %c0_16 = arith.constant 0 : index
    %c128 = arith.constant 128 : index
    %69 = vector.load %arg9[%c0_16, %c128] : memref<8x256xf32, #tpu.memory_space<vmem>>, vector<8x128xf32>
    tpu.vector_store %arg9[%c0_16, %c128], %68 {strides = array<i32>} : memref<8x256xf32, #tpu.memory_space<vmem>>, vector<8x128xf32>,
    %c0_17 = arith.constant 0 : index
    %c0_18 = arith.constant 0 : index
    %70 = vector.load %arg9[%c0_17, %c0_18] : memref<8x256xf32, #tpu.memory_space<vmem>>, vector<8x256xf32>
    %71 = arith.truncf %70 : vector<8x256xf32> to vector<8x256xbf16>
    %c0_19 = arith.constant 0 : index
    %c0_20 = arith.constant 0 : index
    %72 = vector.load %arg5[%c0_19, %c0_20] : memref<256x32xbf16, #tpu.memory_space<vmem>>, vector<256x32xbf16>
    %cst_21 = arith.constant dense<0.000000e+00> : vector<8x32xf32>
    %73 = tpu.matmul %71, %72, %cst_21 {dimension_numbers = #tpu.dot_dimension_numbers<[1], [0], [0], [1], [0, 0, 1, 1], [], []>} : vector<8x256xbf16>, vector<256x32xbf16>, vector<8x32xf32> -> vector<8x32xf32>
    %c0_22 = arith.constant 0 : index
    %c0_23 = arith.constant 0 : index
    %74 = vector.load %arg6[%c0_22, %c0_23] : memref<1x32xf32, #tpu.memory_space<vmem>>, vector<1x32xf32>
    %75 = vector.broadcast %74 : vector<1x32xf32> to vector<8x32xf32>
    %76 = arith.addf %73, %75 : vector<8x32xf32>
    %c0_24 = arith.constant 0 : index
    %c0_25 = arith.constant 0 : index
    %c0_26 = arith.constant 0 : index
    %77 = vector.load %arg7[%c0_24, %c0_25, %c0_26] : memref<1x8x32xf32, #tpu.memory_space<vmem>>, vector<1x8x32xf32>
    %78 = vector.shape_cast %77 : vector<1x8x32xf32> to vector<8x32xf32>
    %79 = vector.shape_cast %76 : vector<8x32xf32> to vector<1x8x32xf32>
    tpu.vector_store %arg7[%c0_24, %c0_25, %c0_26], %79 {strides = array<i32>} : memref<1x8x32xf32, #tpu.memory_space<vmem>>, vector<1x8x32xf32>,
    return
  }
  func.func @transform_0(%arg0: i32, %arg1: i32) -> (i32, i32, i32) {
    %c0_i32 = arith.constant 0 : i32
    %c0_i32_0 = arith.constant 0 : i32
    %c0_i32_1 = arith.constant 0 : i32
    return %arg0, %c0_i32, %c0_i32_0 : i32, i32, i32
  }
  func.func @transform_1(%arg0: i32, %arg1: i32) -> (i32, i32) {
    %c0_i32 = arith.constant 0 : i32
    %c0_i32_0 = arith.constant 0 : i32
    %c0_i32_1 = arith.constant 0 : i32
    return %c0_i32, %c0_i32_0 : i32, i32
  }
  func.func @transform_2(%arg0: i32, %arg1: i32) -> (i32, i32) {
    %c0_i32 = arith.constant 0 : i32
    %c0_i32_0 = arith.constant 0 : i32
    %c0_i32_1 = arith.constant 0 : i32
    return %c0_i32, %c0_i32_0 : i32, i32
  }
  func.func @transform_3(%arg0: i32, %arg1: i32) -> (i32, i32) {
    %c0_i32 = arith.constant 0 : i32
    %c0_i32_0 = arith.constant 0 : i32
    %c0_i32_1 = arith.constant 0 : i32
    return %c0_i32, %c0_i32_0 : i32, i32
  }
  func.func @transform_4(%arg0: i32, %arg1: i32) -> (i32, i32) {
    %c0_i32 = arith.constant 0 : i32
    %c0_i32_0 = arith.constant 0 : i32
    %c0_i32_1 = arith.constant 0 : i32
    return %c0_i32, %c0_i32_0 : i32, i32
  }
  func.func @transform_5(%arg0: i32, %arg1: i32) -> (i32, i32, i32) {
    %c0_i32 = arith.constant 0 : i32
    %c0_i32_0 = arith.constant 0 : i32
    return %arg0, %arg1, %c0_i32 : i32, i32, i32
  }
}

module attributes {stable_mosaic.version = 11 : i64} {
  func.func @_mha_kernel(%arg0: i32, %arg1: i32, %arg2: memref<1x8x32xbf16, #tpu.memory_space<vmem>>, %arg3: memref<32x256xbf16, #tpu.memory_space<vmem>>, %arg4: memref<1x256xf32, #tpu.memory_space<vmem>>, %arg5: memref<256x32xbf16, #tpu.memory_space<vmem>>, %arg6: memref<1x32xf32, #tpu.memory_space<vmem>>, %arg7: memref<1x8x32xf32, #tpu.memory_space<vmem>>, %arg8: memref<8x256xf32, #tpu.memory_space<vmem>>, %arg9: memref<8x256xf32, #tpu.memory_space<vmem>>) attributes {dimension_semantics = [#tpu.dimension_semantics<parallel>, #tpu.dimension_semantics<arbitrary>], iteration_bounds = array<i64: 2, 1>, scalar_prefetch = 0 : i64, scratch_operands = 2 : i64, tpu.core_type = #tpu.core_type<tc>, window_params = [{transform_indices = @transform_0, window_bounds = array<i64: 1, 8, 32>}, {pipeline_mode = #tpu.pipeline_mode<synchronous>, transform_indices = @transform_1, window_bounds = array<i64: 32, 256>}, {pipeline_mode = #tpu.pipeline_mode<synchronous>, transform_indices = @transform_2, window_bounds = array<i64: 1, 256>}, {pipeline_mode = #tpu.pipeline_mode<synchronous>, transform_indices = @transform_3, window_bounds = array<i64: 256, 32>}, {pipeline_mode = #tpu.pipeline_mode<synchronous>, transform_indices = @transform_4, window_bounds = array<i64: 1, 32>}, {transform_indices = @transform_5, window_bounds = array<i64: 1, 8, 32>}]} {
    %c0_i32 = arith.constant 0 : i32
    %0 = arith.cmpi eq, %arg1, %c0_i32 : i32
    %1 = arith.extui %0 : i1 to i32
    %c0_i32_0 = arith.constant 0 : i32
    %2 = arith.cmpi ne, %1, %c0_i32_0 : i32
    scf.if %2 {
      %c0_27 = arith.constant 0 : index
      %c0_28 = arith.constant 0 : index
      %c0_29 = arith.constant 0 : index
      %80 = vector.load %arg2[%c0_27, %c0_28, %c0_29] : memref<1x8x32xbf16, #tpu.memory_space<vmem>>, vector<1x8x32xbf16>
      %81 = vector.shape_cast %80 : vector<1x8x32xbf16> to vector<8x32xbf16>
      %c0_30 = arith.constant 0 : index
      %c0_31 = arith.constant 0 : index
      %82 = vector.load %arg3[%c0_30, %c0_31] : memref<32x256xbf16, #tpu.memory_space<vmem>>, vector<32x256xbf16>
      %cst_32 = arith.constant dense<0.000000e+00> : vector<8x256xf32>
      %83 = tpu.matmul %81, %82, %cst_32 {dimension_numbers = #tpu.dot_dimension_numbers<[1], [0], [0], [1], [0, 0, 1, 1], [], []>} : vector<8x32xbf16>, vector<32x256xbf16>, vector<8x256xf32> -> vector<8x256xf32>
      %c0_33 = arith.constant 0 : index
      %c0_34 = arith.constant 0 : index
      %84 = vector.load %arg4[%c0_33, %c0_34] : memref<1x256xf32, #tpu.memory_space<vmem>>, vector<1x256xf32>
      %85 = vector.broadcast %84 : vector<1x256xf32> to vector<8x256xf32>
      %86 = arith.addf %83, %85 : vector<8x256xf32>
      %c0_35 = arith.constant 0 : index
      %c0_36 = arith.constant 0 : index
      %87 = vector.load %arg8[%c0_35, %c0_36] : memref<8x256xf32, #tpu.memory_space<vmem>>, vector<8x256xf32>
      tpu.vector_store %arg8[%c0_35, %c0_36], %86 {strides = array<i32>} : memref<8x256xf32, #tpu.memory_space<vmem>>, vector<8x256xf32>,
    } else {
    }
    %c0 = arith.constant 0 : index
    %c0_1 = arith.constant 0 : index
    %3 = vector.load %arg8[%c0, %c0_1] : memref<8x256xf32, #tpu.memory_space<vmem>>, vector<8x256xf32>
    %c8_i32 = arith.constant 8 : i32
    %4 = arith.muli %arg1, %c8_i32 : i32
    %5 = tpu.assume_multiple %4, 8 : i32
    %6 = arith.index_cast %5 : i32 to index
    %c0_2 = arith.constant 0 : index
    %7 = vector.load %arg8[%6, %c0_2] : memref<8x256xf32, #tpu.memory_space<vmem>>, vector<8x256xf32>
    %8 = vector.extract_strided_slice %3 {offsets = [0, 0], sizes = [8, 128], strides = [1, 1]} : vector<8x256xf32> to vector<8x128xf32>
    %9 = vector.extract_strided_slice %7 {offsets = [0, 0], sizes = [8, 128], strides = [1, 1]} : vector<8x256xf32> to vector<8x128xf32>
    %10 = arith.mulf %8, %8 : vector<8x128xf32>
    %cst = arith.constant dense<0.000000e+00> : vector<8xf32>
    %11 = vector.multi_reduction <add>, %10, %cst [1] : vector<8x128xf32> to vector<8xf32>
    %12 = vector.shape_cast %11 : vector<8xf32> to vector<8x1xf32>
    %13 = math.rsqrt %12 : vector<8x1xf32>
    %14 = vector.broadcast %13 : vector<8x1xf32> to vector<8x128xf32>
    %15 = arith.mulf %8, %14 : vector<8x128xf32>
    %16 = arith.mulf %9, %9 : vector<8x128xf32>
    %cst_3 = arith.constant dense<0.000000e+00> : vector<8xf32>
    %17 = vector.multi_reduction <add>, %16, %cst_3 [1] : vector<8x128xf32> to vector<8xf32>
    %18 = vector.shape_cast %17 : vector<8xf32> to vector<8x1xf32>
    %19 = math.rsqrt %18 : vector<8x1xf32>
    %20 = vector.broadcast %19 : vector<8x1xf32> to vector<8x128xf32>
    %21 = arith.mulf %9, %20 : vector<8x128xf32>
    %22 = arith.truncf %21 : vector<8x128xf32> to vector<8x128xbf16>
    %23 = arith.truncf %15 : vector<8x128xf32> to vector<8x128xbf16>
    %cst_4 = arith.constant dense<0.000000e+00> : vector<8x8xf32>
    %24 = tpu.matmul %22, %23, %cst_4 {dimension_numbers = #tpu.dot_dimension_numbers<[1], [1], [0], [0], [0, 0, 1, 0], [], []>} : vector<8x128xbf16>, vector<8x128xbf16>, vector<8x8xf32> -> vector<8x8xf32>
    %cst_5 = arith.constant dense<0xFF800000> : vector<8xf32>
    %25 = vector.multi_reduction <maximumf>, %24, %cst_5 [1] : vector<8x8xf32> to vector<8xf32>
    %26 = vector.shape_cast %25 : vector<8xf32> to vector<8x1xf32>
    %27 = vector.broadcast %26 : vector<8x1xf32> to vector<8x8xf32>
    %28 = arith.subf %24, %27 : vector<8x8xf32>
    %29 = math.exp %28 : vector<8x8xf32>
    %cst_6 = arith.constant dense<0.000000e+00> : vector<8xf32>
    %30 = vector.multi_reduction <add>, %29, %cst_6 [1] : vector<8x8xf32> to vector<8xf32>
    %31 = vector.shape_cast %30 : vector<8xf32> to vector<8x1xf32>
    %32 = tpu.reciprocal %31 {approx = true} : vector<8x1xf32> -> vector<8x1xf32>
    %33 = vector.broadcast %32 : vector<8x1xf32> to vector<8x8xf32>
    %34 = arith.mulf %29, %33 : vector<8x8xf32>
    %35 = arith.truncf %34 : vector<8x8xf32> to vector<8x8xbf16>
    %36 = arith.truncf %8 : vector<8x128xf32> to vector<8x128xbf16>
    %cst_7 = arith.constant dense<0.000000e+00> : vector<8x128xf32>
    %37 = tpu.matmul %35, %36, %cst_7 {dimension_numbers = #tpu.dot_dimension_numbers<[1], [0], [0], [1], [0, 0, 1, 1], [], []>} : vector<8x8xbf16>, vector<8x128xbf16>, vector<8x128xf32> -> vector<8x128xf32>
    %c0_8 = arith.constant 0 : index
    %c0_9 = arith.constant 0 : index
    %38 = vector.load %arg9[%c0_8, %c0_9] : memref<8x256xf32, #tpu.memory_space<vmem>>, vector<8x128xf32>
    tpu.vector_store %arg9[%c0_8, %c0_9], %37 {strides = array<i32>} : memref<8x256xf32, #tpu.memory_space<vmem>>, vector<8x128xf32>,
    %39 = vector.extract_strided_slice %3 {offsets = [0, 128], sizes = [8, 128], strides = [1, 1]} : vector<8x256xf32> to vector<8x128xf32>
    %40 = vector.extract_strided_slice %7 {offsets = [0, 128], sizes = [8, 128], strides = [1, 1]} : vector<8x256xf32> to vector<8x128xf32>
    %41 = arith.mulf %39, %39 : vector<8x128xf32>
    %cst_10 = arith.constant dense<0.000000e+00> : vector<8xf32>
    %42 = vector.multi_reduction <add>, %41, %cst_10 [1] : vector<8x128xf32> to vector<8xf32>
    %43 = vector.shape_cast %42 : vector<8xf32> to vector<8x1xf32>
    %44 = math.rsqrt %43 : vector<8x1xf32>
    %45 = vector.broadcast %44 : vector<8x1xf32> to vector<8x128xf32>
    %46 = arith.mulf %39, %45 : vector<8x128xf32>
    %47 = arith.mulf %40, %40 : vector<8x128xf32>
    %cst_11 = arith.constant dense<0.000000e+00> : vector<8xf32>
    %48 = vector.multi_reduction <add>, %47, %cst_11 [1] : vector<8x128xf32> to vector<8xf32>
    %49 = vector.shape_cast %48 : vector<8xf32> to vector<8x1xf32>
    %50 = math.rsqrt %49 : vector<8x1xf32>
    %51 = vector.broadcast %50 : vector<8x1xf32> to vector<8x128xf32>
    %52 = arith.mulf %40, %51 : vector<8x128xf32>
    %53 = arith.truncf %52 : vector<8x128xf32> to vector<8x128xbf16>
    %54 = arith.truncf %46 : vector<8x128xf32> to vector<8x128xbf16>
    %cst_12 = arith.constant dense<0.000000e+00> : vector<8x8xf32>
    %55 = tpu.matmul %53, %54, %cst_12 {dimension_numbers = #tpu.dot_dimension_numbers<[1], [1], [0], [0], [0, 0, 1, 0], [], []>} : vector<8x128xbf16>, vector<8x128xbf16>, vector<8x8xf32> -> vector<8x8xf32>
    %cst_13 = arith.constant dense<0xFF800000> : vector<8xf32>
    %56 = vector.multi_reduction <maximumf>, %55, %cst_13 [1] : vector<8x8xf32> to vector<8xf32>
    %57 = vector.shape_cast %56 : vector<8xf32> to vector<8x1xf32>
    %58 = vector.broadcast %57 : vector<8x1xf32> to vector<8x8xf32>
    %59 = arith.subf %55, %58 : vector<8x8xf32>
    %60 = math.exp %59 : vector<8x8xf32>
    %cst_14 = arith.constant dense<0.000000e+00> : vector<8xf32>
    %61 = vector.multi_reduction <add>, %60, %cst_14 [1] : vector<8x8xf32> to vector<8xf32>
    %62 = vector.shape_cast %61 : vector<8xf32> to vector<8x1xf32>
    %63 = tpu.reciprocal %62 {approx = true} : vector<8x1xf32> -> vector<8x1xf32>
    %64 = vector.broadcast %63 : vector<8x1xf32> to vector<8x8xf32>
    %65 = arith.mulf %60, %64 : vector<8x8xf32>
    %66 = arith.truncf %65 : vector<8x8xf32> to vector<8x8xbf16>
    %67 = arith.truncf %39 : vector<8x128xf32> to vector<8x128xbf16>
    %cst_15 = arith.constant dense<0.000000e+00> : vector<8x128xf32>
    %68 = tpu.matmul %66, %67, %cst_15 {dimension_numbers = #tpu.dot_dimension_numbers<[1], [0], [0], [1], [0, 0, 1, 1], [], []>} : vector<8x8xbf16>, vector<8x128xbf16>, vector<8x128xf32> -> vector<8x128xf32>
    %c0_16 = arith.constant 0 : index
    %c128 = arith.constant 128 : index
    %69 = vector.load %arg9[%c0_16, %c128] : memref<8x256xf32, #tpu.memory_space<vmem>>, vector<8x128xf32>
    tpu.vector_store %arg9[%c0_16, %c128], %68 {strides = array<i32>} : memref<8x256xf32, #tpu.memory_space<vmem>>, vector<8x128xf32>,
    %c0_17 = arith.constant 0 : index
    %c0_18 = arith.constant 0 : index
    %70 = vector.load %arg9[%c0_17, %c0_18] : memref<8x256xf32, #tpu.memory_space<vmem>>, vector<8x256xf32>
    %71 = arith.truncf %70 : vector<8x256xf32> to vector<8x256xbf16>
    %c0_19 = arith.constant 0 : index
    %c0_20 = arith.constant 0 : index
    %72 = vector.load %arg5[%c0_19, %c0_20] : memref<256x32xbf16, #tpu.memory_space<vmem>>, vector<256x32xbf16>
    %cst_21 = arith.constant dense<0.000000e+00> : vector<8x32xf32>
    %73 = tpu.matmul %71, %72, %cst_21 {dimension_numbers = #tpu.dot_dimension_numbers<[1], [0], [0], [1], [0, 0, 1, 1], [], []>} : vector<8x256xbf16>, vector<256x32xbf16>, vector<8x32xf32> -> vector<8x32xf32>
    %c0_22 = arith.constant 0 : index
    %c0_23 = arith.constant 0 : index
    %74 = vector.load %arg6[%c0_22, %c0_23] : memref<1x32xf32, #tpu.memory_space<vmem>>, vector<1x32xf32>
    %75 = vector.broadcast %74 : vector<1x32xf32> to vector<8x32xf32>
    %76 = arith.addf %73, %75 : vector<8x32xf32>
    %c0_24 = arith.constant 0 : index
    %c0_25 = arith.constant 0 : index
    %c0_26 = arith.constant 0 : index
    %77 = vector.load %arg7[%c0_24, %c0_25, %c0_26] : memref<1x8x32xf32, #tpu.memory_space<vmem>>, vector<1x8x32xf32>
    %78 = vector.shape_cast %77 : vector<1x8x32xf32> to vector<8x32xf32>
    %79 = vector.shape_cast %76 : vector<8x32xf32> to vector<1x8x32xf32>
    tpu.vector_store %arg7[%c0_24, %c0_25, %c0_26], %79 {strides = array<i32>} : memref<1x8x32xf32, #tpu.memory_space<vmem>>, vector<1x8x32xf32>,
    return
  }
  func.func @transform_0(%arg0: i32, %arg1: i32) -> (i32, i32, i32) {
    %c0_i32 = arith.constant 0 : i32
    %c0_i32_0 = arith.constant 0 : i32
    %c0_i32_1 = arith.constant 0 : i32
    return %arg0, %c0_i32, %c0_i32_0 : i32, i32, i32
  }
  func.func @transform_1(%arg0: i32, %arg1: i32) -> (i32, i32) {
    %c0_i32 = arith.constant 0 : i32
    %c0_i32_0 = arith.constant 0 : i32
    %c0_i32_1 = arith.constant 0 : i32
    return %c0_i32, %c0_i32_0 : i32, i32
  }
  func.func @transform_2(%arg0: i32, %arg1: i32) -> (i32, i32) {
    %c0_i32 = arith.constant 0 : i32
    %c0_i32_0 = arith.constant 0 : i32
    %c0_i32_1 = arith.constant 0 : i32
    return %c0_i32, %c0_i32_0 : i32, i32
  }
  func.func @transform_3(%arg0: i32, %arg1: i32) -> (i32, i32) {
    %c0_i32 = arith.constant 0 : i32
    %c0_i32_0 = arith.constant 0 : i32
    %c0_i32_1 = arith.constant 0 : i32
    return %c0_i32, %c0_i32_0 : i32, i32
  }
  func.func @transform_4(%arg0: i32, %arg1: i32) -> (i32, i32) {
    %c0_i32 = arith.constant 0 : i32
    %c0_i32_0 = arith.constant 0 : i32
    %c0_i32_1 = arith.constant 0 : i32
    return %c0_i32, %c0_i32_0 : i32, i32
  }
  func.func @transform_5(%arg0: i32, %arg1: i32) -> (i32, i32, i32) {
    %c0_i32 = arith.constant 0 : i32
    %c0_i32_0 = arith.constant 0 : i32
    return %arg0, %arg1, %c0_i32 : i32, i32, i32
  }
}

</mosaic_0001>

<llo_original>
// kernel: tpu_custom_call.1
$region0: #{tpu_custom_call.1}
  #allocation0 [shape = 'u32[]', space=smem, size = 0x4, offset = 0x4, fixed_abs, tag = 'smem constant byte address 0x4 - core index']
  #allocation1 [shape = 'u32[144,128]{1,0:T(1,128)}', space=vmem, size = 0x12000, scoped, tag = 'internal scratch']
  #allocation2 [shape = 'f32[8,256]{1,0:T(8,128)}', space=vmem, size = 0x2000, scoped, tag = 'scratch operand']
  #allocation3 [shape = 'f32[8,256]{1,0:T(8,128)}', space=vmem, size = 0x2000, scoped, tag = 'scratch operand']
  %s0 = inlined_call_operand.vmem [shape: bf16[2,8,32], index: 0, kind: input, shape index: {}]
  %s1 = inlined_call_operand.vmem [shape: bf16[32,256], index: 1, kind: input, shape index: {}]
  %s2 = inlined_call_operand.vmem [shape: f32[1,256], index: 2, kind: input, shape index: {}]
  %s3 = inlined_call_operand.vmem [shape: bf16[256,32], index: 3, kind: input, shape index: {}]
  %s4 = inlined_call_operand.vmem [shape: f32[1,32], index: 4, kind: input, shape index: {}]
  %s5 = inlined_call_operand.hbm [shape: f32[2,8,32], index: 5, kind: output, shape index: {}]
  %s6 = sld [smem:[#allocation0]]
  $region57: #{tpu_custom_call.1} parent=0
    _
  %s8 = ssub.s32 1, %s6
  %s9 = scalar_select 0, %s8, %s6
  $region1: #{tpu_custom_call.1} parent=0
    #allocation4 [shape = 'u8[8192]{0}', space=vmem, size = 0x2000, scoped, tag = 'output window, operand 0']
    #allocation5 [shape = 's32[2]{0}', space=sflag, size = 0x8, scoped, tag = 'scoped memory for tpu_custom_call.1']
    %10 = vsyncpa [#allocation5], 0
    %s11 = scalar_lea.sflag [#allocation5], 1
    %12 = vsyncpa %s11, 0
    loop: start=0, step=1, limit=4
    $region2: #{tpu_custom_call.1} parent=1 // loop_pre_header
      _
    $region3: #{tpu_custom_call.1} parent=1 // loop_header
      %s14 = sphi 0, %s18
      %p15 = scmp.ge.s32.totalorder %s14, 4
      %s21 = sphi 0, %s33
      %s22 = sphi 0, %s29
      %s23 = sphi 0, %s21
      %s24 = sphi 0, %s22
      %s25 = sphi 0, %s23
      %s26 = sphi 0, %s24
      %s36 = sphi 0, %s38
      %s39 = sphi 0, %s36
      %s40 = sphi 0, %s39
      %s56 = sphi 0, %s40
      %s60 = sphi 0, %s60
      %s62 = sphi 0, %s60
      %s63 = sphi 0, %s62
      %s77 = sphi 0, %s63
      %s81 = sphi 0, %s81
      %s83 = sphi 0, %s81
      %s84 = sphi 0, %s83
      %s98 = sphi 0, %s84
      %s102 = sphi 0, %s102
      %s104 = sphi 0, %s102
      %s105 = sphi 0, %s104
      %s119 = sphi 0, %s105
      %s123 = sphi 0, %s123
      %s125 = sphi 0, %s123
      %s126 = sphi 0, %s125
      %s140 = sphi 0, %s126
      %s148 = sphi 0, %s150
      %s151 = sphi 0, %s148
      %s152 = sphi 0, %s151
      %s168 = sphi 0, %s152
    $region4: #{tpu_custom_call.1} parent=1 // loop_header_branch
      %17 = sbr.rel (%p15) target = $region8
    $region5: #{tpu_custom_call.1} parent=1 // loop_body
      %s19 = ssub.s32 %s14, 1
      %s20 = ssub.s32 %s14, 2
      %s27 = sadd.s32 1, %s22
      %p28 = scmp.ge.s32.totalorder %s27, 1
      %s29 = scalar_select %p28, 0, %s27
      %s30 = sadd.s32 1, %s21
      %s31 = scalar_select %p28, %s30, %s21
      %p32 = scmp.ge.s32.totalorder %s31, 2
      %s33 = scalar_select %p32, 0, %s31
      %s34 = ssub.s32 %s21, %s33
      %p35 = scmp.eq.s32.totalorder %s34, 0
      %s37 = sadd.s32 %s36, 1
      %s38 = scalar_select %p35, %s36, %s37
      %p41 = pneg %p35
      %p42 = scmp.eq.s32.totalorder %s14, 1
      %p43 = por %p41, %p42
      %p44 = scmp.ne.s32.totalorder %s36, %s39
      %p45 = scmp.eq.s32.totalorder %s14, 0
      %p46 = por %p44, %p45
      %p47 = scmp.ne.s32.totalorder %s36, %s39
      %p48 = scmp.eq.s32.totalorder %s19, 1
      %p49 = por %p47, %p48
      %p50 = scmp.ne.s32.totalorder %s39, %s40
      %p51 = scmp.eq.s32.totalorder %s19, 0
      %p52 = por %p50, %p51
      %p53 = scmp.ne.s32.totalorder %s39, %s40
      %p54 = scmp.eq.s32.totalorder %s20, 1
      %p55 = por %p53, %p54
      %p57 = scmp.ne.s32.totalorder %s40, %s56
      %p58 = scmp.eq.s32.totalorder %s20, 0
      %p59 = por %p57, %p58
      %s61 = sadd.s32 %s60, 1
      %p64 = scmp.eq.s32.totalorder %s14, 1
      %p65 = scmp.ne.s32.totalorder %s60, %s62
      %p66 = scmp.eq.s32.totalorder %s14, 0
      %p67 = por %p65, %p66
      %p68 = scmp.ne.s32.totalorder %s60, %s62
      %p69 = scmp.eq.s32.totalorder %s19, 1
      %p70 = por %p68, %p69
      %p71 = scmp.ne.s32.totalorder %s62, %s63
      %p72 = scmp.eq.s32.totalorder %s19, 0
      %p73 = por %p71, %p72
      %p74 = scmp.ne.s32.totalorder %s62, %s63
      %p75 = scmp.eq.s32.totalorder %s20, 1
      %p76 = por %p74, %p75
      %p78 = scmp.ne.s32.totalorder %s63, %s77
      %p79 = scmp.eq.s32.totalorder %s20, 0
      %p80 = por %p78, %p79
      %s82 = sadd.s32 %s81, 1
      %p85 = scmp.eq.s32.totalorder %s14, 1
      %p86 = scmp.ne.s32.totalorder %s81, %s83
      %p87 = scmp.eq.s32.totalorder %s14, 0
      %p88 = por %p86, %p87
      %p89 = scmp.ne.s32.totalorder %s81, %s83
      %p90 = scmp.eq.s32.totalorder %s19, 1
      %p91 = por %p89, %p90
      %p92 = scmp.ne.s32.totalorder %s83, %s84
      %p93 = scmp.eq.s32.totalorder %s19, 0
      %p94 = por %p92, %p93
      %p95 = scmp.ne.s32.totalorder %s83, %s84
      %p96 = scmp.eq.s32.totalorder %s20, 1
      %p97 = por %p95, %p96
      %p99 = scmp.ne.s32.totalorder %s84, %s98
      %p100 = scmp.eq.s32.totalorder %s20, 0
      %p101 = por %p99, %p100
      %s103 = sadd.s32 %s102, 1
      %p106 = scmp.eq.s32.totalorder %s14, 1
      %p107 = scmp.ne.s32.totalorder %s102, %s104
      %p108 = scmp.eq.s32.totalorder %s14, 0
      %p109 = por %p107, %p108
      %p110 = scmp.ne.s32.totalorder %s102, %s104
      %p111 = scmp.eq.s32.totalorder %s19, 1
      %p112 = por %p110, %p111
      %p113 = scmp.ne.s32.totalorder %s104, %s105
      %p114 = scmp.eq.s32.totalorder %s19, 0
      %p115 = por %p113, %p114
      %p116 = scmp.ne.s32.totalorder %s104, %s105
      %p117 = scmp.eq.s32.totalorder %s20, 1
      %p118 = por %p116, %p117
      %p120 = scmp.ne.s32.totalorder %s105, %s119
      %p121 = scmp.eq.s32.totalorder %s20, 0
      %p122 = por %p120, %p121
      %s124 = sadd.s32 %s123, 1
      %p127 = scmp.eq.s32.totalorder %s14, 1
      %p128 = scmp.ne.s32.totalorder %s123, %s125
      %p129 = scmp.eq.s32.totalorder %s14, 0
      %p130 = por %p128, %p129
      %p131 = scmp.ne.s32.totalorder %s123, %s125
      %p132 = scmp.eq.s32.totalorder %s19, 1
      %p133 = por %p131, %p132
      %p134 = scmp.ne.s32.totalorder %s125, %s126
      %p135 = scmp.eq.s32.totalorder %s19, 0
      %p136 = por %p134, %p135
      %p137 = scmp.ne.s32.totalorder %s125, %s126
      %p138 = scmp.eq.s32.totalorder %s20, 1
      %p139 = por %p137, %p138
      %p141 = scmp.ne.s32.totalorder %s126, %s140
      %p142 = scmp.eq.s32.totalorder %s20, 0
      %p143 = por %p141, %p142
      %s144 = ssub.s32 %s21, %s33
      %s145 = ssub.s32 %s22, %s29
      %s146 = sor.u32 %s144, %s145
      %p147 = scmp.eq.s32.totalorder %s146, 0
      %s149 = sadd.s32 %s148, 1
      %s150 = scalar_select %p147, %s148, %s149
      %p153 = pneg %p147
      %p154 = scmp.eq.s32.totalorder %s14, 1
      %p155 = por %p153, %p154
      %p156 = scmp.ne.s32.totalorder %s148, %s151
      %p157 = scmp.eq.s32.totalorder %s14, 0
      %p158 = por %p156, %p157
      %p159 = scmp.ne.s32.totalorder %s148, %s151
      %p160 = scmp.eq.s32.totalorder %s19, 1
      %p161 = por %p159, %p160
      %p162 = scmp.ne.s32.totalorder %s151, %s152
      %p163 = scmp.eq.s32.totalorder %s19, 0
      %p164 = por %p162, %p163
      %p165 = scmp.ne.s32.totalorder %s151, %s152
      %p166 = scmp.eq.s32.totalorder %s20, 1
      %p167 = por %p165, %p166
      %p169 = scmp.ne.s32.totalorder %s152, %s168
      %p170 = scmp.eq.s32.totalorder %s20, 0
      %p171 = por %p169, %p170
      %p172 = scmp.le.s32.totalorder 1, %s14
      %p173 = scmp.lt.s32.totalorder %s14, 3
      %p174 = pnand %p172, %p173
      %p175 = pneg %p174
      // Predicated region
      $region9: #{tpu_custom_call.1} parent=5 // pred_check
        _
      $region10: #{tpu_custom_call.1} parent=5 // pred_check_branch
        %177 = sbr.rel (%p174) target = $region12
      $region11: #{tpu_custom_call.1} parent=5 // pred_region
        %s178 = ssub.s32 %s14, 1
        // Predicated region
        $region13: #{tpu_custom_call.1} parent=11 // pred_check
          %p179 = pneg %p73
        $region14: #{tpu_custom_call.1} parent=11 // pred_check_branch
          %181 = sbr.rel (%p179) target = $region16
        $region15: #{tpu_custom_call.1} parent=11 // pred_region
          _
        $region16: #{tpu_custom_call.1} parent=11 // pred_fallthru
          _
        // Predicated region
        $region17: #{tpu_custom_call.1} parent=11 // pred_check
          %p182 = pneg %p94
        $region18: #{tpu_custom_call.1} parent=11 // pred_check_branch
          %184 = sbr.rel (%p182) target = $region20
        $region19: #{tpu_custom_call.1} parent=11 // pred_region
          _
        $region20: #{tpu_custom_call.1} parent=11 // pred_fallthru
          _
        // Predicated region
        $region21: #{tpu_custom_call.1} parent=11 // pred_check
          %p185 = pneg %p115
        $region22: #{tpu_custom_call.1} parent=11 // pred_check_branch
          %187 = sbr.rel (%p185) target = $region24
        $region23: #{tpu_custom_call.1} parent=11 // pred_region
          _
        $region24: #{tpu_custom_call.1} parent=11 // pred_fallthru
          _
        // Predicated region
        $region25: #{tpu_custom_call.1} parent=11 // pred_check
          %p188 = pneg %p136
        $region26: #{tpu_custom_call.1} parent=11 // pred_check_branch
          %190 = sbr.rel (%p188) target = $region28
        $region27: #{tpu_custom_call.1} parent=11 // pred_region
          _
        $region28: #{tpu_custom_call.1} parent=11 // pred_fallthru
          _
      $region12: #{tpu_custom_call.1} parent=5 // pred_fallthru
        _
      %p191 = scmp.lt.s32.totalorder %s14, 2
      // Predicated region
      $region29: #{tpu_custom_call.1} parent=5 // pred_check
        %p192 = pneg %p191
      $region30: #{tpu_custom_call.1} parent=5 // pred_check_branch
        %194 = sbr.rel (%p192) target = $region32
      $region31: #{tpu_custom_call.1} parent=5 // pred_region
        // Predicated region
        $region33: #{tpu_custom_call.1} parent=31 // pred_check
          %p195 = pneg %p46
        $region34: #{tpu_custom_call.1} parent=31 // pred_check_branch
          %197 = sbr.rel (%p195) target = $region36
        $region35: #{tpu_custom_call.1} parent=31 // pred_region
          %p198 = scmp.lt.s32.totalorder %s21, 1
          %s199 = scalar_select %p198, %s21, 1
          %s200 = smul.addr %s199, 4
          %s201 = scalar_lea.vmem %s0, %s200
        $region36: #{tpu_custom_call.1} parent=31 // pred_fallthru
          _
      $region32: #{tpu_custom_call.1} parent=5 // pred_fallthru
        _
      %p202 = scmp.le.s32.totalorder 1, %s14
      %p203 = scmp.lt.s32.totalorder %s14, 3
      %p204 = pnand %p202, %p203
      %p205 = pneg %p204
      // Predicated region
      $region37: #{tpu_custom_call.1} parent=5 // pred_check
        _
      $region38: #{tpu_custom_call.1} parent=5 // pred_check_branch
        %207 = sbr.rel (%p204) target = $region40
      $region39: #{tpu_custom_call.1} parent=5 // pred_region
        %s208 = ssub.s32 %s14, 1
        %p209 = scmp.lt.s32.totalorder %s23, 1
        %s210 = scalar_select %p209, %s23, 1
        %s211 = smul.addr %s210, 4
        %s212 = scalar_lea.vmem %s0, %s211
        %p213 = pneg %p52
        %p214 = pneg %p49
        %p215 = pneg %p73
        %p216 = pneg %p70
        %p217 = pneg %p94
        %p218 = pneg %p91
        %p219 = pneg %p115
        %p220 = pneg %p112
        %p221 = pneg %p136
        %p222 = pneg %p133
        %p223 = pneg %p164
        %p224 = pneg %p161
        %s225 = sand.u32 %s151, 1
        %s226 = scalar_lea.sflag [#allocation5], %s225
        %s227 = sand.u32 %s151, 1
        %s228 = smul.addr %s227, 8
        %s229 = scalar_lea.vmem [#allocation4], %s228
        %p230 = scmp.lt.s32.totalorder %s23, 1
        %s231 = scalar_select %p230, %s23, 1
        %s232 = smul.addr %s231, 4
        %s233 = scalar_lea.vmem %s0, %s232
        %p235 = scmp.eq.s32.totalorder %s24, 0
        // Predicated region
        $region41: #{tpu_custom_call.1} parent=39 // pred_check
          %p236 = pneg %p235
        $region42: #{tpu_custom_call.1} parent=39 // pred_check_branch
          %238 = sbr.rel (%p236) target = $region44
        $region43: #{tpu_custom_call.1} parent=39 // pred_region
          %v239 = vld [vmem:[%s233] sm:$0xf]
          %v240 = vld [vmem:[%s1] sm:$0xff]
          %v241 = vld [vmem:[%s1 + $0x8] sm:$0xff]
          %v242 = vld [vmem:[%s1 + $0x10] sm:$0xff]
          %v243 = vld [vmem:[%s1 + $0x18] sm:$0xff]
          %v244 = vld [vmem:[%s2] sm:$0x3]
          %v246 = vlaneseq
          %v247 = vshrl.u32 %v246, 7
          %v248 = vsub.s32 0, %v247
          %v249 = vrot.slane %v244, %v248
          %v250 = vlaneseq
          %v251 = vshrl.u32 %v250, 7
          %v252 = vsub.s32 1, %v251
          %v253 = vrot.slane %v244, %v252
          %v260 = vunpack.c.l.b16 %v240
          %v261 = vunpack.c.h.b16 %v240
          %v262 = vunpack.c.l.b16 %v241
          %v263 = vunpack.c.h.b16 %v241
          %v264 = vunpack.c.l.b16 %v242
          %v265 = vunpack.c.h.b16 %v242
          %v266 = vunpack.c.l.b16 %v243
          %v267 = vunpack.c.h.b16 %v243
          %v268 = vpack.c.b16 %v262, %v260
          %v269 = vpack.c.b16 %v263, %v261
          %v270 = vpack.c.b16 %v266, %v264
          %v271 = vpack.c.b16 %v267, %v265
          %vm276 = vcmask 261120
          %v278 = vsel %vm276, %v239, 0
          %280 = vmatprep.subr.bf16.mxu0 %v269
          %281 = vmatpush1.bf16.msra.mxu0 %v268
          %282 = vmatprep.subr.bf16.mxu0 %v271
          %283 = vmatpush1.bf16.msra.mxu0 %v270
          %284 = vmatprep.subr.bf16.mxu0 0
          %285 = vmatpush1.bf16.msra.mxu0 0
          %286 = vmatprep.subr.bf16.mxu0 0
          %287 = vmatpush1.bf16.msra.mxu0 0
          %288 = vmatprep.subr.bf16.mxu0 0
          %289 = vmatpush1.bf16.msra.mxu0 0
          %290 = vmatprep.subr.bf16.mxu0 0
          %291 = vmatpush1.bf16.msra.mxu0 0
          %292 = vmatprep.subr.bf16.mxu0 0
          %293 = vmatpush1.bf16.msra.mxu0 0
          %294 = vmatprep.subr.bf16.mxu0 0
          %295 = vmatpush1.bf16.msra.mxu0 0
          %296 = vmatprep.subr.bf16.mxu0 0
          %297 = vmatpush1.bf16.msra.mxu0 0
          %298 = vmatprep.subr.bf16.mxu0 0
          %299 = vmatpush1.bf16.msra.mxu0 0
          %300 = vmatprep.subr.bf16.mxu0 0
          %301 = vmatpush1.bf16.msra.mxu0 0
          %302 = vmatprep.subr.bf16.mxu0 0
          %303 = vmatpush1.bf16.msra.mxu0 0
          %304 = vmatprep.subr.bf16.mxu0 0
          %305 = vmatpush1.bf16.msra.mxu0 0
          %306 = vmatprep.subr.bf16.mxu0 0
          %307 = vmatpush1.bf16.msra.mxu0 0
          %308 = vmatprep.subr.bf16.mxu0 0
          %309 = vmatpush1.bf16.msra.mxu0 0
          %310 = vmatprep.subr.bf16.mxu0 0
          %311 = vmatpush1.bf16.msra.mxu0 0
          %312 = vmatprep.mubr.bf16.mxu0 0
          %313 = vmatmul.mubr.bf16.gmra.mrb[0].mxu0 %v278
          %v314 = vpop.f32.mrb[0].mxu0
          %v315 = vadd.f32 %v249, %v314
          %v316 = vpop.f32.mrb[0].mxu0
          %v317 = vadd.f32 %v253, %v316
          %v318 = vpop.f32.mrb[0].mxu0
          %v319 = vpop.f32.mrb[0].mxu0
          %320 = vdwg.mxu0
          %321 = vst [vmem:[#allocation2] sm:$0xff] %v315
          %322 = vst [vmem:[#allocation2 + $0x8] sm:$0xff] %v317
        $region44: #{tpu_custom_call.1} parent=39 // pred_fallthru
          _
        %v323 = vld [vmem:[#allocation2] sm:$0xff]
        %v324 = vld [vmem:[#allocation2 + $0x8] sm:$0xff]
        %s325 = smul.u32 %s24, 8
        %s326 = sshra.s32 %s325, 3
        %s327 = sand.u32 %s325, 7
        %s328 = smul.u32 %s326, 2
        %s329 = smul.addr %s328, 8
        %s330 = scalar_lea.vmem [#allocation2], %s329
        %v331 = vld [vmem:[%s330] sm:$0xff]
        %v332 = vld [vmem:[%s330 + $0x8] sm:$0xff]
        %v333 = vmul.f32 %v323, %v323
        %334 = vadd.xlane.f32.xlu0 %v333
        %v335 = vpop.xlane.xlu0 %334
        %v336 = vrsqrt.pop %v335
        %v337 = vmul.f32 %v323, %v336
        %v338 = vmul.f32 %v331, %v331
        %339 = vadd.xlane.f32.xlu0 %v338
        %v340 = vpop.xlane.xlu0 %339
        %v341 = vrsqrt.pop %v340
        %v342 = vmul.f32 %v331, %v341
        %v343 = vpack.c.bf16 %v342, %v342
        %v344 = vpack.c.bf16 %v337, %v337
        %345 = vmatprep.subr.bf16.mxu0 0
        %346 = vmatpush1.bf16.xpose.msra.mxu0 %v344
        %347 = vmatprep.subr.bf16.mxu0 0
        %348 = vmatpush1.bf16.xpose.msra.mxu0 0
        %349 = vmatprep.subr.bf16.mxu0 0
        %350 = vmatpush1.bf16.xpose.msra.mxu0 0
        %351 = vmatprep.subr.bf16.mxu0 0
        %352 = vmatpush1.bf16.xpose.msra.mxu0 0
        %353 = vmatprep.subr.bf16.mxu0 0
        %354 = vmatpush1.bf16.xpose.msra.mxu0 0
        %355 = vmatprep.subr.bf16.mxu0 0
        %356 = vmatpush1.bf16.xpose.msra.mxu0 0
        %357 = vmatprep.subr.bf16.mxu0 0
        %358 = vmatpush1.bf16.xpose.msra.mxu0 0
        %359 = vmatprep.subr.bf16.mxu0 0
        %360 = vmatpush1.bf16.xpose.msra.mxu0 0
        %361 = vmatprep.subr.bf16.mxu0 0
        %362 = vmatpush1.bf16.xpose.msra.mxu0 0
        %363 = vmatprep.subr.bf16.mxu0 0
        %364 = vmatpush1.bf16.xpose.msra.mxu0 0
        %365 = vmatprep.subr.bf16.mxu0 0
        %366 = vmatpush1.bf16.xpose.msra.mxu0 0
        %367 = vmatprep.subr.bf16.mxu0 0
        %368 = vmatpush1.bf16.xpose.msra.mxu0 0
        %369 = vmatprep.subr.bf16.mxu0 0
        %370 = vmatpush1.bf16.xpose.msra.mxu0 0
        %371 = vmatprep.subr.bf16.mxu0 0
        %372 = vmatpush1.bf16.xpose.msra.mxu0 0
        %373 = vmatprep.subr.bf16.mxu0 0
        %374 = vmatpush1.bf16.xpose.msra.mxu0 0
        %375 = vmatprep.subr.bf16.mxu0 0
        %376 = vmatpush1.bf16.xpose.msra.mxu0 0
        %377 = vmatprep.mubr.bf16.mxu0 0
        %378 = vmatmul.mubr.bf16.gmra.mrb[0].mxu0 %v343
        %v379 = vpop.f32.mrb[0].mxu0
        %v380 = vadd.f32 0.0, %v379
        %v381 = vpop.f32.mrb[0].mxu0
        %v382 = vpop.f32.mrb[0].mxu0
        %v383 = vpop.f32.mrb[0].mxu0
        %384 = vdwg.mxu0
        %vm385 = vcmask 64512
        %v386 = vsel %vm385, %v380, -inf
        %387 = vmax.xlane.f32.xlu0 %v386
        %v388 = vpop.xlane.xlu0 %387
        %v389 = vsub.f32 %v380, %v388
        %v390 = vmul.f32 %v389, 1.442695
        %v391 = vpow.pop %v390
        %v392 = vsel %vm385, %v391, 0.0
        %393 = vadd.xlane.f32.xlu0 %v392
        %v394 = vpop.xlane.xlu0 %393
        %v395 = vrcp.pop %v394
        %v396 = vmul.f32 %v391, %v395
        %v397 = vpack.c.bf16 %v396, %v396
        %v398 = vpack.c.bf16 %v323, %v323
        %v400 = vsel %vm385, %v397, 0
        %vm402 = vcmask 1043456
        %v404 = vsel %vm402, %v398, 0
        %406 = vmatprep.subr.bf16.mxu0 0
        %407 = vmatpush1.bf16.msra.mxu0 %v404
        %408 = vmatprep.subr.bf16.mxu0 0
        %409 = vmatpush1.bf16.msra.mxu0 0
        %410 = vmatprep.subr.bf16.mxu0 0
        %411 = vmatpush1.bf16.msra.mxu0 0
        %412 = vmatprep.subr.bf16.mxu0 0
        %413 = vmatpush1.bf16.msra.mxu0 0
        %414 = vmatprep.subr.bf16.mxu0 0
        %415 = vmatpush1.bf16.msra.mxu0 0
        %416 = vmatprep.subr.bf16.mxu0 0
        %417 = vmatpush1.bf16.msra.mxu0 0
        %418 = vmatprep.subr.bf16.mxu0 0
        %419 = vmatpush1.bf16.msra.mxu0 0
        %420 = vmatprep.subr.bf16.mxu0 0
        %421 = vmatpush1.bf16.msra.mxu0 0
        %422 = vmatprep.subr.bf16.mxu0 0
        %423 = vmatpush1.bf16.msra.mxu0 0
        %424 = vmatprep.subr.bf16.mxu0 0
        %425 = vmatpush1.bf16.msra.mxu0 0
        %426 = vmatprep.subr.bf16.mxu0 0
        %427 = vmatpush1.bf16.msra.mxu0 0
        %428 = vmatprep.subr.bf16.mxu0 0
        %429 = vmatpush1.bf16.msra.mxu0 0
        %430 = vmatprep.subr.bf16.mxu0 0
        %431 = vmatpush1.bf16.msra.mxu0 0
        %432 = vmatprep.subr.bf16.mxu0 0
        %433 = vmatpush1.bf16.msra.mxu0 0
        %434 = vmatprep.subr.bf16.mxu0 0
        %435 = vmatpush1.bf16.msra.mxu0 0
        %436 = vmatprep.subr.bf16.mxu0 0
        %437 = vmatpush1.bf16.msra.mxu0 0
        %438 = vmatprep.mubr.bf16.mxu0 0
        %439 = vmatmul.mubr.bf16.gmra.mrb[0].mxu0 %v400
        %v440 = vpop.f32.mrb[0].mxu0
        %v441 = vadd.f32 0.0, %v440
        %v442 = vpop.f32.mrb[0].mxu0
        %v443 = vpop.f32.mrb[0].mxu0
        %v444 = vpop.f32.mrb[0].mxu0
        %445 = vdwg.mxu0
        %446 = vst [vmem:[#allocation3] sm:$0xff] %v441
        %v447 = vmul.f32 %v324, %v324
        %448 = vadd.xlane.f32.xlu0 %v447
        %v449 = vpop.xlane.xlu0 %448
        %v450 = vrsqrt.pop %v449
        %v451 = vmul.f32 %v324, %v450
        %v452 = vmul.f32 %v332, %v332
        %453 = vadd.xlane.f32.xlu0 %v452
        %v454 = vpop.xlane.xlu0 %453
        %v455 = vrsqrt.pop %v454
        %v456 = vmul.f32 %v332, %v455
        %v457 = vpack.c.bf16 %v456, %v456
        %v458 = vpack.c.bf16 %v451, %v451
        %459 = vmatprep.subr.bf16.mxu0 0
        %460 = vmatpush1.bf16.xpose.msra.mxu0 %v458
        %461 = vmatprep.subr.bf16.mxu0 0
        %462 = vmatpush1.bf16.xpose.msra.mxu0 0
        %463 = vmatprep.subr.bf16.mxu0 0
        %464 = vmatpush1.bf16.xpose.msra.mxu0 0
        %465 = vmatprep.subr.bf16.mxu0 0
        %466 = vmatpush1.bf16.xpose.msra.mxu0 0
        %467 = vmatprep.subr.bf16.mxu0 0
        %468 = vmatpush1.bf16.xpose.msra.mxu0 0
        %469 = vmatprep.subr.bf16.mxu0 0
        %470 = vmatpush1.bf16.xpose.msra.mxu0 0
        %471 = vmatprep.subr.bf16.mxu0 0
        %472 = vmatpush1.bf16.xpose.msra.mxu0 0
        %473 = vmatprep.subr.bf16.mxu0 0
        %474 = vmatpush1.bf16.xpose.msra.mxu0 0
        %475 = vmatprep.subr.bf16.mxu0 0
        %476 = vmatpush1.bf16.xpose.msra.mxu0 0
        %477 = vmatprep.subr.bf16.mxu0 0
        %478 = vmatpush1.bf16.xpose.msra.mxu0 0
        %479 = vmatprep.subr.bf16.mxu0 0
        %480 = vmatpush1.bf16.xpose.msra.mxu0 0
        %481 = vmatprep.subr.bf16.mxu0 0
        %482 = vmatpush1.bf16.xpose.msra.mxu0 0
        %483 = vmatprep.subr.bf16.mxu0 0
        %484 = vmatpush1.bf16.xpose.msra.mxu0 0
        %485 = vmatprep.subr.bf16.mxu0 0
        %486 = vmatpush1.bf16.xpose.msra.mxu0 0
        %487 = vmatprep.subr.bf16.mxu0 0
        %488 = vmatpush1.bf16.xpose.msra.mxu0 0
        %489 = vmatprep.subr.bf16.mxu0 0
        %490 = vmatpush1.bf16.xpose.msra.mxu0 0
        %491 = vmatprep.mubr.bf16.mxu0 0
        %492 = vmatmul.mubr.bf16.gmra.mrb[0].mxu0 %v457
        %v493 = vpop.f32.mrb[0].mxu0
        %v494 = vadd.f32 0.0, %v493
        %v495 = vpop.f32.mrb[0].mxu0
        %v496 = vpop.f32.mrb[0].mxu0
        %v497 = vpop.f32.mrb[0].mxu0
        %498 = vdwg.mxu0
        %v499 = vsel %vm385, %v494, -inf
        %500 = vmax.xlane.f32.xlu0 %v499
        %v501 = vpop.xlane.xlu0 %500
        %v502 = vsub.f32 %v494, %v501
        %v503 = vmul.f32 %v502, 1.442695
        %v504 = vpow.pop %v503
        %v505 = vsel %vm385, %v504, 0.0
        %506 = vadd.xlane.f32.xlu0 %v505
        %v507 = vpop.xlane.xlu0 %506
        %v508 = vrcp.pop %v507
        %v509 = vmul.f32 %v504, %v508
        %v510 = vpack.c.bf16 %v509, %v509
        %v511 = vpack.c.bf16 %v324, %v324
        %v513 = vsel %vm385, %v510, 0
        %v516 = vsel %vm402, %v511, 0
        %518 = vmatprep.subr.bf16.mxu0 0
        %519 = vmatpush1.bf16.msra.mxu0 %v516
        %520 = vmatprep.subr.bf16.mxu0 0
        %521 = vmatpush1.bf16.msra.mxu0 0
        %522 = vmatprep.subr.bf16.mxu0 0
        %523 = vmatpush1.bf16.msra.mxu0 0
        %524 = vmatprep.subr.bf16.mxu0 0
        %525 = vmatpush1.bf16.msra.mxu0 0
        %526 = vmatprep.subr.bf16.mxu0 0
        %527 = vmatpush1.bf16.msra.mxu0 0
        %528 = vmatprep.subr.bf16.mxu0 0
        %529 = vmatpush1.bf16.msra.mxu0 0
        %530 = vmatprep.subr.bf16.mxu0 0
        %531 = vmatpush1.bf16.msra.mxu0 0
        %532 = vmatprep.subr.bf16.mxu0 0
        %533 = vmatpush1.bf16.msra.mxu0 0
        %534 = vmatprep.subr.bf16.mxu0 0
        %535 = vmatpush1.bf16.msra.mxu0 0
        %536 = vmatprep.subr.bf16.mxu0 0
        %537 = vmatpush1.bf16.msra.mxu0 0
        %538 = vmatprep.subr.bf16.mxu0 0
        %539 = vmatpush1.bf16.msra.mxu0 0
        %540 = vmatprep.subr.bf16.mxu0 0
        %541 = vmatpush1.bf16.msra.mxu0 0
        %542 = vmatprep.subr.bf16.mxu0 0
        %543 = vmatpush1.bf16.msra.mxu0 0
        %544 = vmatprep.subr.bf16.mxu0 0
        %545 = vmatpush1.bf16.msra.mxu0 0
        %546 = vmatprep.subr.bf16.mxu0 0
        %547 = vmatpush1.bf16.msra.mxu0 0
        %548 = vmatprep.subr.bf16.mxu0 0
        %549 = vmatpush1.bf16.msra.mxu0 0
        %550 = vmatprep.mubr.bf16.mxu0 0
        %551 = vmatmul.mubr.bf16.gmra.mrb[0].mxu0 %v513
        %v552 = vpop.f32.mrb[0].mxu0
        %v553 = vadd.f32 0.0, %v552
        %v554 = vpop.f32.mrb[0].mxu0
        %v555 = vpop.f32.mrb[0].mxu0
        %v556 = vpop.f32.mrb[0].mxu0
        %557 = vdwg.mxu0
        %558 = vst [vmem:[#allocation3 + $0x8] sm:$0xff] %v553
        %v559 = vld [vmem:[#allocation3] sm:$0xff]
        %v560 = vld [vmem:[#allocation3 + $0x8] sm:$0xff]
        %v561 = vpack.c.bf16 %v559, %v559
        %v562 = vpack.c.bf16 %v560, %v560
        %v563 = vld [vmem:[%s3] sm:$0xf]
        %v564 = vld [vmem:[%s3 + $0x4] sm:$0xf]
        %v565 = vld [vmem:[%s3 + $0x8] sm:$0xf]
        %v566 = vld [vmem:[%s3 + $0xc] sm:$0xf]
        %v567 = vld [vmem:[%s3 + $0x10] sm:$0xf]
        %v568 = vld [vmem:[%s3 + $0x14] sm:$0xf]
        %v569 = vld [vmem:[%s3 + $0x18] sm:$0xf]
        %v570 = vld [vmem:[%s3 + $0x1c] sm:$0xf]
        %v571 = vld [vmem:[%s3 + $0x20] sm:$0xf]
        %v572 = vld [vmem:[%s3 + $0x24] sm:$0xf]
        %v573 = vld [vmem:[%s3 + $0x28] sm:$0xf]
        %v574 = vld [vmem:[%s3 + $0x2c] sm:$0xf]
        %v575 = vld [vmem:[%s3 + $0x30] sm:$0xf]
        %v576 = vld [vmem:[%s3 + $0x34] sm:$0xf]
        %v577 = vld [vmem:[%s3 + $0x38] sm:$0xf]
        %v578 = vld [vmem:[%s3 + $0x3c] sm:$0xf]
        %v579 = vld [vmem:[%s3 + $0x40] sm:$0xf]
        %v580 = vld [vmem:[%s3 + $0x44] sm:$0xf]
        %v581 = vld [vmem:[%s3 + $0x48] sm:$0xf]
        %v582 = vld [vmem:[%s3 + $0x4c] sm:$0xf]
        %v583 = vld [vmem:[%s3 + $0x50] sm:$0xf]
        %v584 = vld [vmem:[%s3 + $0x54] sm:$0xf]
        %v585 = vld [vmem:[%s3 + $0x58] sm:$0xf]
        %v586 = vld [vmem:[%s3 + $0x5c] sm:$0xf]
        %v587 = vld [vmem:[%s3 + $0x60] sm:$0xf]
        %v588 = vld [vmem:[%s3 + $0x64] sm:$0xf]
        %v589 = vld [vmem:[%s3 + $0x68] sm:$0xf]
        %v590 = vld [vmem:[%s3 + $0x6c] sm:$0xf]
        %v591 = vld [vmem:[%s3 + $0x70] sm:$0xf]
        %v592 = vld [vmem:[%s3 + $0x74] sm:$0xf]
        %v593 = vld [vmem:[%s3 + $0x78] sm:$0xf]
        %v594 = vld [vmem:[%s3 + $0x7c] sm:$0xf]
        %v595 = vld [vmem:[%s4] sm:$0x1]
        %v597 = vlaneseq
        %v598 = vshrl.u32 %v597, 7
        %v599 = vsub.s32 0, %v598
        %v600 = vrot.slane %v595, %v599
        %v634 = vunpack.c.l.b16 %v563
        %v635 = vunpack.c.l.b16 %v564
        %v636 = vunpack.c.l.b16 %v565
        %v637 = vunpack.c.l.b16 %v566
        %v638 = vunpack.c.l.b16 %v567
        %v639 = vunpack.c.l.b16 %v568
        %v640 = vunpack.c.l.b16 %v569
        %v641 = vunpack.c.l.b16 %v570
        %v642 = vunpack.c.l.b16 %v571
        %v643 = vunpack.c.l.b16 %v572
        %v644 = vunpack.c.l.b16 %v573
        %v645 = vunpack.c.l.b16 %v574
        %v646 = vunpack.c.l.b16 %v575
        %v647 = vunpack.c.l.b16 %v576
        %v648 = vunpack.c.l.b16 %v577
        %v649 = vunpack.c.l.b16 %v578
        %v650 = vunpack.c.l.b16 %v579
        %v651 = vunpack.c.l.b16 %v580
        %v652 = vunpack.c.l.b16 %v581
        %v653 = vunpack.c.l.b16 %v582
        %v654 = vunpack.c.l.b16 %v583
        %v655 = vunpack.c.l.b16 %v584
        %v656 = vunpack.c.l.b16 %v585
        %v657 = vunpack.c.l.b16 %v586
        %v658 = vunpack.c.l.b16 %v587
        %v659 = vunpack.c.l.b16 %v588
        %v660 = vunpack.c.l.b16 %v589
        %v661 = vunpack.c.l.b16 %v590
        %v662 = vunpack.c.l.b16 %v591
        %v663 = vunpack.c.l.b16 %v592
        %v664 = vunpack.c.l.b16 %v593
        %v665 = vunpack.c.l.b16 %v594
        %v666 = vpack.c.b16 %v635, %v634
        %v667 = vpack.c.b16 %v637, %v636
        %v668 = vpack.c.b16 %v639, %v638
        %v669 = vpack.c.b16 %v641, %v640
        %v670 = vpack.c.b16 %v643, %v642
        %v671 = vpack.c.b16 %v645, %v644
        %v672 = vpack.c.b16 %v647, %v646
        %v673 = vpack.c.b16 %v649, %v648
        %v674 = vpack.c.b16 %v651, %v650
        %v675 = vpack.c.b16 %v653, %v652
        %v676 = vpack.c.b16 %v655, %v654
        %v677 = vpack.c.b16 %v657, %v656
        %v678 = vpack.c.b16 %v659, %v658
        %v679 = vpack.c.b16 %v661, %v660
        %v680 = vpack.c.b16 %v663, %v662
        %v681 = vpack.c.b16 %v665, %v664
        %698 = vmatprep.subr.bf16.mxu0 0
        %699 = vmatpush1.bf16.msra.mxu0 %v666
        %700 = vmatprep.subr.bf16.mxu0 0
        %701 = vmatpush1.bf16.msra.mxu0 %v667
        %702 = vmatprep.subr.bf16.mxu0 0
        %703 = vmatpush1.bf16.msra.mxu0 %v668
        %704 = vmatprep.subr.bf16.mxu0 0
        %705 = vmatpush1.bf16.msra.mxu0 %v669
        %706 = vmatprep.subr.bf16.mxu0 0
        %707 = vmatpush1.bf16.msra.mxu0 %v670
        %708 = vmatprep.subr.bf16.mxu0 0
        %709 = vmatpush1.bf16.msra.mxu0 %v671
        %710 = vmatprep.subr.bf16.mxu0 0
        %711 = vmatpush1.bf16.msra.mxu0 %v672
        %712 = vmatprep.subr.bf16.mxu0 0
        %713 = vmatpush1.bf16.msra.mxu0 %v673
        %714 = vmatprep.subr.bf16.mxu0 0
        %715 = vmatpush1.bf16.msra.mxu0 %v674
        %716 = vmatprep.subr.bf16.mxu0 0
        %717 = vmatpush1.bf16.msra.mxu0 %v675
        %718 = vmatprep.subr.bf16.mxu0 0
        %719 = vmatpush1.bf16.msra.mxu0 %v676
        %720 = vmatprep.subr.bf16.mxu0 0
        %721 = vmatpush1.bf16.msra.mxu0 %v677
        %722 = vmatprep.subr.bf16.mxu0 0
        %723 = vmatpush1.bf16.msra.mxu0 %v678
        %724 = vmatprep.subr.bf16.mxu0 0
        %725 = vmatpush1.bf16.msra.mxu0 %v679
        %726 = vmatprep.subr.bf16.mxu0 0
        %727 = vmatpush1.bf16.msra.mxu0 %v680
        %728 = vmatprep.subr.bf16.mxu0 0
        %729 = vmatpush1.bf16.msra.mxu0 %v681
        %730 = vmatprep.mubr.bf16.mxu0 %v562
        %731 = vmatmul.mubr.bf16.gmra.mrb[0].mxu0 %v561
        %v732 = vpop.f32.mrb[0].mxu0
        %v733 = vadd.f32 %v600, %v732
        %v734 = vpop.f32.mrb[0].mxu0
        %v735 = vpop.f32.mrb[0].mxu0
        %v736 = vpop.f32.mrb[0].mxu0
        %737 = vdwg.mxu0
        %vm738 = vcmask 261120
        %739 = vst.msk [vmem:[%s229] sm:$0xff] %vm738, %v733
        %s740 = sand.u32 %s151, 1
        %s741 = scalar_lea.sflag [#allocation5], %s740
        %s742 = sand.u32 %s151, 1
        %s743 = smul.addr %s742, 8
        %s744 = scalar_lea.vmem [#allocation4], %s743
        // Predicated region
        $region45: #{tpu_custom_call.1} parent=39 // pred_check
          %p745 = pneg %p161
        $region46: #{tpu_custom_call.1} parent=39 // pred_check_branch
          %747 = sbr.rel (%p745) target = $region48
        $region47: #{tpu_custom_call.1} parent=39 // pred_region
          %s749 = ssub.s32 128, 128
          %750 = vsyncadd %s741, %s749
          %s751 = sadd.s32 %s24, %s23
          %s752 = smul.addr %s751, 128
          %s753 = scalar_lea.hbm %s5, %s752
          %s755 = sshll.u32 %s744, 4
          %s756 = int_to_ptr.vmem [resolvable:$true] %s755
          %758 = dma.vmem_to_hbm [thread:$0]  %s756, 128, %s753, %s741
        $region48: #{tpu_custom_call.1} parent=39 // pred_fallthru
          _
      $region40: #{tpu_custom_call.1} parent=5 // pred_fallthru
        _
      %p759 = scmp.le.s32.totalorder 2, %s14
      // Predicated region
      $region49: #{tpu_custom_call.1} parent=5 // pred_check
        %p760 = pneg %p759
      $region50: #{tpu_custom_call.1} parent=5 // pred_check_branch
        %762 = sbr.rel (%p760) target = $region52
      $region51: #{tpu_custom_call.1} parent=5 // pred_region
        %s763 = ssub.s32 %s14, 2
        // Predicated region
        $region53: #{tpu_custom_call.1} parent=51 // pred_check
          %p764 = pneg %p167
        $region54: #{tpu_custom_call.1} parent=51 // pred_check_branch
          %766 = sbr.rel (%p764) target = $region56
        $region55: #{tpu_custom_call.1} parent=51 // pred_region
          %s767 = sand.u32 %s152, 1
          %s768 = scalar_lea.sflag [#allocation5], %s767
          %s769 = sand.u32 %s152, 1
          %s770 = smul.addr %s769, 8
          %s771 = scalar_lea.vmem [#allocation4], %s770
          %772 = dma.done %s768, 128
        $region56: #{tpu_custom_call.1} parent=51 // pred_fallthru
          _
      $region52: #{tpu_custom_call.1} parent=5 // pred_fallthru
        _
    $region6: #{tpu_custom_call.1} parent=1 // loop_footer
      %s18 = sadd.s32 1, %s14
    $region7: #{tpu_custom_call.1} parent=1 // loop_footer_branch
      %13 = sbr.rel target = $region3
    $region8: #{tpu_custom_call.1} parent=1 // loop_exit
      _
    %773 = vsyncpa [#allocation5], 1
    %s774 = scalar_lea.sflag [#allocation5], 1
    %775 = vsyncpa %s774, 1

// kernel: tpu_custom_call.1
$region0: #{tpu_custom_call.1}
  #allocation0 [shape = 'u32[]', space=smem, size = 0x4, offset = 0x4, fixed_abs, tag = 'smem constant byte address 0x4 - core index']
  #allocation1 [shape = 'u32[144,128]{1,0:T(1,128)}', space=vmem, size = 0x12000, scoped, tag = 'internal scratch']
  #allocation2 [shape = 'f32[8,256]{1,0:T(8,128)}', space=vmem, size = 0x2000, scoped, tag = 'scratch operand']
  #allocation3 [shape = 'f32[8,256]{1,0:T(8,128)}', space=vmem, size = 0x2000, scoped, tag = 'scratch operand']
  %s0 = inlined_call_operand.vmem [shape: bf16[2,8,32], index: 0, kind: input, shape index: {}]
  %s1 = inlined_call_operand.vmem [shape: bf16[32,256], index: 1, kind: input, shape index: {}]
  %s2 = inlined_call_operand.vmem [shape: f32[1,256], index: 2, kind: input, shape index: {}]
  %s3 = inlined_call_operand.vmem [shape: bf16[256,32], index: 3, kind: input, shape index: {}]
  %s4 = inlined_call_operand.vmem [shape: f32[1,32], index: 4, kind: input, shape index: {}]
  %s5 = inlined_call_operand.hbm [shape: f32[2,8,32], index: 5, kind: output, shape index: {}]
  %s6 = sld [smem:[#allocation0]]
  $region57: #{tpu_custom_call.1} parent=0
    _
  %s8 = ssub.s32 1, %s6
  %s9 = scalar_select 0, %s8, %s6
  $region1: #{tpu_custom_call.1} parent=0
    #allocation4 [shape = 'u8[8192]{0}', space=vmem, size = 0x2000, scoped, tag = 'output window, operand 0']
    #allocation5 [shape = 's32[2]{0}', space=sflag, size = 0x8, scoped, tag = 'scoped memory for tpu_custom_call.1']
    %10 = vsyncpa [#allocation5], 0
    %s11 = scalar_lea.sflag [#allocation5], 1
    %12 = vsyncpa %s11, 0
    loop: start=0, step=1, limit=4
    $region2: #{tpu_custom_call.1} parent=1 // loop_pre_header
      _
    $region3: #{tpu_custom_call.1} parent=1 // loop_header
      %s14 = sphi 0, %s18
      %p15 = scmp.ge.s32.totalorder %s14, 4
      %s21 = sphi 0, %s33
      %s22 = sphi 0, %s29
      %s23 = sphi 0, %s21
      %s24 = sphi 0, %s22
      %s25 = sphi 0, %s23
      %s26 = sphi 0, %s24
      %s36 = sphi 0, %s38
      %s39 = sphi 0, %s36
      %s40 = sphi 0, %s39
      %s56 = sphi 0, %s40
      %s60 = sphi 0, %s60
      %s62 = sphi 0, %s60
      %s63 = sphi 0, %s62
      %s77 = sphi 0, %s63
      %s81 = sphi 0, %s81
      %s83 = sphi 0, %s81
      %s84 = sphi 0, %s83
      %s98 = sphi 0, %s84
      %s102 = sphi 0, %s102
      %s104 = sphi 0, %s102
      %s105 = sphi 0, %s104
      %s119 = sphi 0, %s105
      %s123 = sphi 0, %s123
      %s125 = sphi 0, %s123
      %s126 = sphi 0, %s125
      %s140 = sphi 0, %s126
      %s148 = sphi 0, %s150
      %s151 = sphi 0, %s148
      %s152 = sphi 0, %s151
      %s168 = sphi 0, %s152
    $region4: #{tpu_custom_call.1} parent=1 // loop_header_branch
      %17 = sbr.rel (%p15) target = $region8
    $region5: #{tpu_custom_call.1} parent=1 // loop_body
      %s19 = ssub.s32 %s14, 1
      %s20 = ssub.s32 %s14, 2
      %s27 = sadd.s32 1, %s22
      %p28 = scmp.ge.s32.totalorder %s27, 1
      %s29 = scalar_select %p28, 0, %s27
      %s30 = sadd.s32 1, %s21
      %s31 = scalar_select %p28, %s30, %s21
      %p32 = scmp.ge.s32.totalorder %s31, 2
      %s33 = scalar_select %p32, 0, %s31
      %s34 = ssub.s32 %s21, %s33
      %p35 = scmp.eq.s32.totalorder %s34, 0
      %s37 = sadd.s32 %s36, 1
      %s38 = scalar_select %p35, %s36, %s37
      %p41 = pneg %p35
      %p42 = scmp.eq.s32.totalorder %s14, 1
      %p43 = por %p41, %p42
      %p44 = scmp.ne.s32.totalorder %s36, %s39
      %p45 = scmp.eq.s32.totalorder %s14, 0
      %p46 = por %p44, %p45
      %p47 = scmp.ne.s32.totalorder %s36, %s39
      %p48 = scmp.eq.s32.totalorder %s19, 1
      %p49 = por %p47, %p48
      %p50 = scmp.ne.s32.totalorder %s39, %s40
      %p51 = scmp.eq.s32.totalorder %s19, 0
      %p52 = por %p50, %p51
      %p53 = scmp.ne.s32.totalorder %s39, %s40
      %p54 = scmp.eq.s32.totalorder %s20, 1
      %p55 = por %p53, %p54
      %p57 = scmp.ne.s32.totalorder %s40, %s56
      %p58 = scmp.eq.s32.totalorder %s20, 0
      %p59 = por %p57, %p58
      %s61 = sadd.s32 %s60, 1
      %p64 = scmp.eq.s32.totalorder %s14, 1
      %p65 = scmp.ne.s32.totalorder %s60, %s62
      %p66 = scmp.eq.s32.totalorder %s14, 0
      %p67 = por %p65, %p66
      %p68 = scmp.ne.s32.totalorder %s60, %s62
      %p69 = scmp.eq.s32.totalorder %s19, 1
      %p70 = por %p68, %p69
      %p71 = scmp.ne.s32.totalorder %s62, %s63
      %p72 = scmp.eq.s32.totalorder %s19, 0
      %p73 = por %p71, %p72
      %p74 = scmp.ne.s32.totalorder %s62, %s63
      %p75 = scmp.eq.s32.totalorder %s20, 1
      %p76 = por %p74, %p75
      %p78 = scmp.ne.s32.totalorder %s63, %s77
      %p79 = scmp.eq.s32.totalorder %s20, 0
      %p80 = por %p78, %p79
      %s82 = sadd.s32 %s81, 1
      %p85 = scmp.eq.s32.totalorder %s14, 1
      %p86 = scmp.ne.s32.totalorder %s81, %s83
      %p87 = scmp.eq.s32.totalorder %s14, 0
      %p88 = por %p86, %p87
      %p89 = scmp.ne.s32.totalorder %s81, %s83
      %p90 = scmp.eq.s32.totalorder %s19, 1
      %p91 = por %p89, %p90
      %p92 = scmp.ne.s32.totalorder %s83, %s84
      %p93 = scmp.eq.s32.totalorder %s19, 0
      %p94 = por %p92, %p93
      %p95 = scmp.ne.s32.totalorder %s83, %s84
      %p96 = scmp.eq.s32.totalorder %s20, 1
      %p97 = por %p95, %p96
      %p99 = scmp.ne.s32.totalorder %s84, %s98
      %p100 = scmp.eq.s32.totalorder %s20, 0
      %p101 = por %p99, %p100
      %s103 = sadd.s32 %s102, 1
      %p106 = scmp.eq.s32.totalorder %s14, 1
      %p107 = scmp.ne.s32.totalorder %s102, %s104
      %p108 = scmp.eq.s32.totalorder %s14, 0
      %p109 = por %p107, %p108
      %p110 = scmp.ne.s32.totalorder %s102, %s104
      %p111 = scmp.eq.s32.totalorder %s19, 1
      %p112 = por %p110, %p111
      %p113 = scmp.ne.s32.totalorder %s104, %s105
      %p114 = scmp.eq.s32.totalorder %s19, 0
      %p115 = por %p113, %p114
      %p116 = scmp.ne.s32.totalorder %s104, %s105
      %p117 = scmp.eq.s32.totalorder %s20, 1
      %p118 = por %p116, %p117
      %p120 = scmp.ne.s32.totalorder %s105, %s119
      %p121 = scmp.eq.s32.totalorder %s20, 0
      %p122 = por %p120, %p121
      %s124 = sadd.s32 %s123, 1
      %p127 = scmp.eq.s32.totalorder %s14, 1
      %p128 = scmp.ne.s32.totalorder %s123, %s125
      %p129 = scmp.eq.s32.totalorder %s14, 0
      %p130 = por %p128, %p129
      %p131 = scmp.ne.s32.totalorder %s123, %s125
      %p132 = scmp.eq.s32.totalorder %s19, 1
      %p133 = por %p131, %p132
      %p134 = scmp.ne.s32.totalorder %s125, %s126
      %p135 = scmp.eq.s32.totalorder %s19, 0
      %p136 = por %p134, %p135
      %p137 = scmp.ne.s32.totalorder %s125, %s126
      %p138 = scmp.eq.s32.totalorder %s20, 1
      %p139 = por %p137, %p138
      %p141 = scmp.ne.s32.totalorder %s126, %s140
      %p142 = scmp.eq.s32.totalorder %s20, 0
      %p143 = por %p141, %p142
      %s144 = ssub.s32 %s21, %s33
      %s145 = ssub.s32 %s22, %s29
      %s146 = sor.u32 %s144, %s145
      %p147 = scmp.eq.s32.totalorder %s146, 0
      %s149 = sadd.s32 %s148, 1
      %s150 = scalar_select %p147, %s148, %s149
      %p153 = pneg %p147
      %p154 = scmp.eq.s32.totalorder %s14, 1
      %p155 = por %p153, %p154
      %p156 = scmp.ne.s32.totalorder %s148, %s151
      %p157 = scmp.eq.s32.totalorder %s14, 0
      %p158 = por %p156, %p157
      %p159 = scmp.ne.s32.totalorder %s148, %s151
      %p160 = scmp.eq.s32.totalorder %s19, 1
      %p161 = por %p159, %p160
      %p162 = scmp.ne.s32.totalorder %s151, %s152
      %p163 = scmp.eq.s32.totalorder %s19, 0
      %p164 = por %p162, %p163
      %p165 = scmp.ne.s32.totalorder %s151, %s152
      %p166 = scmp.eq.s32.totalorder %s20, 1
      %p167 = por %p165, %p166
      %p169 = scmp.ne.s32.totalorder %s152, %s168
      %p170 = scmp.eq.s32.totalorder %s20, 0
      %p171 = por %p169, %p170
      %p172 = scmp.le.s32.totalorder 1, %s14
      %p173 = scmp.lt.s32.totalorder %s14, 3
      %p174 = pnand %p172, %p173
      %p175 = pneg %p174
      // Predicated region
      $region9: #{tpu_custom_call.1} parent=5 // pred_check
        _
      $region10: #{tpu_custom_call.1} parent=5 // pred_check_branch
        %177 = sbr.rel (%p174) target = $region12
      $region11: #{tpu_custom_call.1} parent=5 // pred_region
        %s178 = ssub.s32 %s14, 1
        // Predicated region
        $region13: #{tpu_custom_call.1} parent=11 // pred_check
          %p179 = pneg %p73
        $region14: #{tpu_custom_call.1} parent=11 // pred_check_branch
          %181 = sbr.rel (%p179) target = $region16
        $region15: #{tpu_custom_call.1} parent=11 // pred_region
          _
        $region16: #{tpu_custom_call.1} parent=11 // pred_fallthru
          _
        // Predicated region
        $region17: #{tpu_custom_call.1} parent=11 // pred_check
          %p182 = pneg %p94
        $region18: #{tpu_custom_call.1} parent=11 // pred_check_branch
          %184 = sbr.rel (%p182) target = $region20
        $region19: #{tpu_custom_call.1} parent=11 // pred_region
          _
        $region20: #{tpu_custom_call.1} parent=11 // pred_fallthru
          _
        // Predicated region
        $region21: #{tpu_custom_call.1} parent=11 // pred_check
          %p185 = pneg %p115
        $region22: #{tpu_custom_call.1} parent=11 // pred_check_branch
          %187 = sbr.rel (%p185) target = $region24
        $region23: #{tpu_custom_call.1} parent=11 // pred_region
          _
        $region24: #{tpu_custom_call.1} parent=11 // pred_fallthru
          _
        // Predicated region
        $region25: #{tpu_custom_call.1} parent=11 // pred_check
          %p188 = pneg %p136
        $region26: #{tpu_custom_call.1} parent=11 // pred_check_branch
          %190 = sbr.rel (%p188) target = $region28
        $region27: #{tpu_custom_call.1} parent=11 // pred_region
          _
        $region28: #{tpu_custom_call.1} parent=11 // pred_fallthru
          _
      $region12: #{tpu_custom_call.1} parent=5 // pred_fallthru
        _
      %p191 = scmp.lt.s32.totalorder %s14, 2
      // Predicated region
      $region29: #{tpu_custom_call.1} parent=5 // pred_check
        %p192 = pneg %p191
      $region30: #{tpu_custom_call.1} parent=5 // pred_check_branch
        %194 = sbr.rel (%p192) target = $region32
      $region31: #{tpu_custom_call.1} parent=5 // pred_region
        // Predicated region
        $region33: #{tpu_custom_call.1} parent=31 // pred_check
          %p195 = pneg %p46
        $region34: #{tpu_custom_call.1} parent=31 // pred_check_branch
          %197 = sbr.rel (%p195) target = $region36
        $region35: #{tpu_custom_call.1} parent=31 // pred_region
          %p198 = scmp.lt.s32.totalorder %s21, 1
          %s199 = scalar_select %p198, %s21, 1
          %s200 = smul.addr %s199, 4
          %s201 = scalar_lea.vmem %s0, %s200
        $region36: #{tpu_custom_call.1} parent=31 // pred_fallthru
          _
      $region32: #{tpu_custom_call.1} parent=5 // pred_fallthru
        _
      %p202 = scmp.le.s32.totalorder 1, %s14
      %p203 = scmp.lt.s32.totalorder %s14, 3
      %p204 = pnand %p202, %p203
      %p205 = pneg %p204
      // Predicated region
      $region37: #{tpu_custom_call.1} parent=5 // pred_check
        _
      $region38: #{tpu_custom_call.1} parent=5 // pred_check_branch
        %207 = sbr.rel (%p204) target = $region40
      $region39: #{tpu_custom_call.1} parent=5 // pred_region
        %s208 = ssub.s32 %s14, 1
        %p209 = scmp.lt.s32.totalorder %s23, 1
        %s210 = scalar_select %p209, %s23, 1
        %s211 = smul.addr %s210, 4
        %s212 = scalar_lea.vmem %s0, %s211
        %p213 = pneg %p52
        %p214 = pneg %p49
        %p215 = pneg %p73
        %p216 = pneg %p70
        %p217 = pneg %p94
        %p218 = pneg %p91
        %p219 = pneg %p115
        %p220 = pneg %p112
        %p221 = pneg %p136
        %p222 = pneg %p133
        %p223 = pneg %p164
        %p224 = pneg %p161
        %s225 = sand.u32 %s151, 1
        %s226 = scalar_lea.sflag [#allocation5], %s225
        %s227 = sand.u32 %s151, 1
        %s228 = smul.addr %s227, 8
        %s229 = scalar_lea.vmem [#allocation4], %s228
        %p230 = scmp.lt.s32.totalorder %s23, 1
        %s231 = scalar_select %p230, %s23, 1
        %s232 = smul.addr %s231, 4
        %s233 = scalar_lea.vmem %s0, %s232
        %p235 = scmp.eq.s32.totalorder %s24, 0
        // Predicated region
        $region41: #{tpu_custom_call.1} parent=39 // pred_check
          %p236 = pneg %p235
        $region42: #{tpu_custom_call.1} parent=39 // pred_check_branch
          %238 = sbr.rel (%p236) target = $region44
        $region43: #{tpu_custom_call.1} parent=39 // pred_region
          %v239 = vld [vmem:[%s233] sm:$0xf]
          %v240 = vld [vmem:[%s1] sm:$0xff]
          %v241 = vld [vmem:[%s1 + $0x8] sm:$0xff]
          %v242 = vld [vmem:[%s1 + $0x10] sm:$0xff]
          %v243 = vld [vmem:[%s1 + $0x18] sm:$0xff]
          %v244 = vld [vmem:[%s2] sm:$0x3]
          %v246 = vlaneseq
          %v247 = vshrl.u32 %v246, 7
          %v248 = vsub.s32 0, %v247
          %v249 = vrot.slane %v244, %v248
          %v250 = vlaneseq
          %v251 = vshrl.u32 %v250, 7
          %v252 = vsub.s32 1, %v251
          %v253 = vrot.slane %v244, %v252
          %v260 = vunpack.c.l.b16 %v240
          %v261 = vunpack.c.h.b16 %v240
          %v262 = vunpack.c.l.b16 %v241
          %v263 = vunpack.c.h.b16 %v241
          %v264 = vunpack.c.l.b16 %v242
          %v265 = vunpack.c.h.b16 %v242
          %v266 = vunpack.c.l.b16 %v243
          %v267 = vunpack.c.h.b16 %v243
          %v268 = vpack.c.b16 %v262, %v260
          %v269 = vpack.c.b16 %v263, %v261
          %v270 = vpack.c.b16 %v266, %v264
          %v271 = vpack.c.b16 %v267, %v265
          %vm276 = vcmask 261120
          %v278 = vsel %vm276, %v239, 0
          %280 = vmatprep.subr.bf16.mxu0 %v269
          %281 = vmatpush1.bf16.msra.mxu0 %v268
          %282 = vmatprep.subr.bf16.mxu0 %v271
          %283 = vmatpush1.bf16.msra.mxu0 %v270
          %284 = vmatprep.subr.bf16.mxu0 0
          %285 = vmatpush1.bf16.msra.mxu0 0
          %286 = vmatprep.subr.bf16.mxu0 0
          %287 = vmatpush1.bf16.msra.mxu0 0
          %288 = vmatprep.subr.bf16.mxu0 0
          %289 = vmatpush1.bf16.msra.mxu0 0
          %290 = vmatprep.subr.bf16.mxu0 0
          %291 = vmatpush1.bf16.msra.mxu0 0
          %292 = vmatprep.subr.bf16.mxu0 0
          %293 = vmatpush1.bf16.msra.mxu0 0
          %294 = vmatprep.subr.bf16.mxu0 0
          %295 = vmatpush1.bf16.msra.mxu0 0
          %296 = vmatprep.subr.bf16.mxu0 0
          %297 = vmatpush1.bf16.msra.mxu0 0
          %298 = vmatprep.subr.bf16.mxu0 0
          %299 = vmatpush1.bf16.msra.mxu0 0
          %300 = vmatprep.subr.bf16.mxu0 0
          %301 = vmatpush1.bf16.msra.mxu0 0
          %302 = vmatprep.subr.bf16.mxu0 0
          %303 = vmatpush1.bf16.msra.mxu0 0
          %304 = vmatprep.subr.bf16.mxu0 0
          %305 = vmatpush1.bf16.msra.mxu0 0
          %306 = vmatprep.subr.bf16.mxu0 0
          %307 = vmatpush1.bf16.msra.mxu0 0
          %308 = vmatprep.subr.bf16.mxu0 0
          %309 = vmatpush1.bf16.msra.mxu0 0
          %310 = vmatprep.subr.bf16.mxu0 0
          %311 = vmatpush1.bf16.msra.mxu0 0
          %312 = vmatprep.mubr.bf16.mxu0 0
          %313 = vmatmul.mubr.bf16.gmra.mrb[0].mxu0 %v278
          %v314 = vpop.f32.mrb[0].mxu0
          %v315 = vadd.f32 %v249, %v314
          %v316 = vpop.f32.mrb[0].mxu0
          %v317 = vadd.f32 %v253, %v316
          %v318 = vpop.f32.mrb[0].mxu0
          %v319 = vpop.f32.mrb[0].mxu0
          %320 = vdwg.mxu0
          %321 = vst [vmem:[#allocation2] sm:$0xff] %v315
          %322 = vst [vmem:[#allocation2 + $0x8] sm:$0xff] %v317
        $region44: #{tpu_custom_call.1} parent=39 // pred_fallthru
          _
        %v323 = vld [vmem:[#allocation2] sm:$0xff]
        %v324 = vld [vmem:[#allocation2 + $0x8] sm:$0xff]
        %s325 = smul.u32 %s24, 8
        %s326 = sshra.s32 %s325, 3
        %s327 = sand.u32 %s325, 7
        %s328 = smul.u32 %s326, 2
        %s329 = smul.addr %s328, 8
        %s330 = scalar_lea.vmem [#allocation2], %s329
        %v331 = vld [vmem:[%s330] sm:$0xff]
        %v332 = vld [vmem:[%s330 + $0x8] sm:$0xff]
        %v333 = vmul.f32 %v323, %v323
        %334 = vadd.xlane.f32.xlu0 %v333
        %v335 = vpop.xlane.xlu0 %334
        %v336 = vrsqrt.pop %v335
        %v337 = vmul.f32 %v323, %v336
        %v338 = vmul.f32 %v331, %v331
        %339 = vadd.xlane.f32.xlu0 %v338
        %v340 = vpop.xlane.xlu0 %339
        %v341 = vrsqrt.pop %v340
        %v342 = vmul.f32 %v331, %v341
        %v343 = vpack.c.bf16 %v342, %v342
        %v344 = vpack.c.bf16 %v337, %v337
        %345 = vmatprep.subr.bf16.mxu0 0
        %346 = vmatpush1.bf16.xpose.msra.mxu0 %v344
        %347 = vmatprep.subr.bf16.mxu0 0
        %348 = vmatpush1.bf16.xpose.msra.mxu0 0
        %349 = vmatprep.subr.bf16.mxu0 0
        %350 = vmatpush1.bf16.xpose.msra.mxu0 0
        %351 = vmatprep.subr.bf16.mxu0 0
        %352 = vmatpush1.bf16.xpose.msra.mxu0 0
        %353 = vmatprep.subr.bf16.mxu0 0
        %354 = vmatpush1.bf16.xpose.msra.mxu0 0
        %355 = vmatprep.subr.bf16.mxu0 0
        %356 = vmatpush1.bf16.xpose.msra.mxu0 0
        %357 = vmatprep.subr.bf16.mxu0 0
        %358 = vmatpush1.bf16.xpose.msra.mxu0 0
        %359 = vmatprep.subr.bf16.mxu0 0
        %360 = vmatpush1.bf16.xpose.msra.mxu0 0
        %361 = vmatprep.subr.bf16.mxu0 0
        %362 = vmatpush1.bf16.xpose.msra.mxu0 0
        %363 = vmatprep.subr.bf16.mxu0 0
        %364 = vmatpush1.bf16.xpose.msra.mxu0 0
        %365 = vmatprep.subr.bf16.mxu0 0
        %366 = vmatpush1.bf16.xpose.msra.mxu0 0
        %367 = vmatprep.subr.bf16.mxu0 0
        %368 = vmatpush1.bf16.xpose.msra.mxu0 0
        %369 = vmatprep.subr.bf16.mxu0 0
        %370 = vmatpush1.bf16.xpose.msra.mxu0 0
        %371 = vmatprep.subr.bf16.mxu0 0
        %372 = vmatpush1.bf16.xpose.msra.mxu0 0
        %373 = vmatprep.subr.bf16.mxu0 0
        %374 = vmatpush1.bf16.xpose.msra.mxu0 0
        %375 = vmatprep.subr.bf16.mxu0 0
        %376 = vmatpush1.bf16.xpose.msra.mxu0 0
        %377 = vmatprep.mubr.bf16.mxu0 0
        %378 = vmatmul.mubr.bf16.gmra.mrb[0].mxu0 %v343
        %v379 = vpop.f32.mrb[0].mxu0
        %v380 = vadd.f32 0.0, %v379
        %v381 = vpop.f32.mrb[0].mxu0
        %v382 = vpop.f32.mrb[0].mxu0
        %v383 = vpop.f32.mrb[0].mxu0
        %384 = vdwg.mxu0
        %vm385 = vcmask 64512
        %v386 = vsel %vm385, %v380, -inf
        %387 = vmax.xlane.f32.xlu0 %v386
        %v388 = vpop.xlane.xlu0 %387
        %v389 = vsub.f32 %v380, %v388
        %v390 = vmul.f32 %v389, 1.442695
        %v391 = vpow.pop %v390
        %v392 = vsel %vm385, %v391, 0.0
        %393 = vadd.xlane.f32.xlu0 %v392
        %v394 = vpop.xlane.xlu0 %393
        %v395 = vrcp.pop %v394
        %v396 = vmul.f32 %v391, %v395
        %v397 = vpack.c.bf16 %v396, %v396
        %v398 = vpack.c.bf16 %v323, %v323
        %v400 = vsel %vm385, %v397, 0
        %vm402 = vcmask 1043456
        %v404 = vsel %vm402, %v398, 0
        %406 = vmatprep.subr.bf16.mxu0 0
        %407 = vmatpush1.bf16.msra.mxu0 %v404
        %408 = vmatprep.subr.bf16.mxu0 0
        %409 = vmatpush1.bf16.msra.mxu0 0
        %410 = vmatprep.subr.bf16.mxu0 0
        %411 = vmatpush1.bf16.msra.mxu0 0
        %412 = vmatprep.subr.bf16.mxu0 0
        %413 = vmatpush1.bf16.msra.mxu0 0
        %414 = vmatprep.subr.bf16.mxu0 0
        %415 = vmatpush1.bf16.msra.mxu0 0
        %416 = vmatprep.subr.bf16.mxu0 0
        %417 = vmatpush1.bf16.msra.mxu0 0
        %418 = vmatprep.subr.bf16.mxu0 0
        %419 = vmatpush1.bf16.msra.mxu0 0
        %420 = vmatprep.subr.bf16.mxu0 0
        %421 = vmatpush1.bf16.msra.mxu0 0
        %422 = vmatprep.subr.bf16.mxu0 0
        %423 = vmatpush1.bf16.msra.mxu0 0
        %424 = vmatprep.subr.bf16.mxu0 0
        %425 = vmatpush1.bf16.msra.mxu0 0
        %426 = vmatprep.subr.bf16.mxu0 0
        %427 = vmatpush1.bf16.msra.mxu0 0
        %428 = vmatprep.subr.bf16.mxu0 0
        %429 = vmatpush1.bf16.msra.mxu0 0
        %430 = vmatprep.subr.bf16.mxu0 0
        %431 = vmatpush1.bf16.msra.mxu0 0
        %432 = vmatprep.subr.bf16.mxu0 0
        %433 = vmatpush1.bf16.msra.mxu0 0
        %434 = vmatprep.subr.bf16.mxu0 0
        %435 = vmatpush1.bf16.msra.mxu0 0
        %436 = vmatprep.subr.bf16.mxu0 0
        %437 = vmatpush1.bf16.msra.mxu0 0
        %438 = vmatprep.mubr.bf16.mxu0 0
        %439 = vmatmul.mubr.bf16.gmra.mrb[0].mxu0 %v400
        %v440 = vpop.f32.mrb[0].mxu0
        %v441 = vadd.f32 0.0, %v440
        %v442 = vpop.f32.mrb[0].mxu0
        %v443 = vpop.f32.mrb[0].mxu0
        %v444 = vpop.f32.mrb[0].mxu0
        %445 = vdwg.mxu0
        %446 = vst [vmem:[#allocation3] sm:$0xff] %v441
        %v447 = vmul.f32 %v324, %v324
        %448 = vadd.xlane.f32.xlu0 %v447
        %v449 = vpop.xlane.xlu0 %448
        %v450 = vrsqrt.pop %v449
        %v451 = vmul.f32 %v324, %v450
        %v452 = vmul.f32 %v332, %v332
        %453 = vadd.xlane.f32.xlu0 %v452
        %v454 = vpop.xlane.xlu0 %453
        %v455 = vrsqrt.pop %v454
        %v456 = vmul.f32 %v332, %v455
        %v457 = vpack.c.bf16 %v456, %v456
        %v458 = vpack.c.bf16 %v451, %v451
        %459 = vmatprep.subr.bf16.mxu0 0
        %460 = vmatpush1.bf16.xpose.msra.mxu0 %v458
        %461 = vmatprep.subr.bf16.mxu0 0
        %462 = vmatpush1.bf16.xpose.msra.mxu0 0
        %463 = vmatprep.subr.bf16.mxu0 0
        %464 = vmatpush1.bf16.xpose.msra.mxu0 0
        %465 = vmatprep.subr.bf16.mxu0 0
        %466 = vmatpush1.bf16.xpose.msra.mxu0 0
        %467 = vmatprep.subr.bf16.mxu0 0
        %468 = vmatpush1.bf16.xpose.msra.mxu0 0
        %469 = vmatprep.subr.bf16.mxu0 0
        %470 = vmatpush1.bf16.xpose.msra.mxu0 0
        %471 = vmatprep.subr.bf16.mxu0 0
        %472 = vmatpush1.bf16.xpose.msra.mxu0 0
        %473 = vmatprep.subr.bf16.mxu0 0
        %474 = vmatpush1.bf16.xpose.msra.mxu0 0
        %475 = vmatprep.subr.bf16.mxu0 0
        %476 = vmatpush1.bf16.xpose.msra.mxu0 0
        %477 = vmatprep.subr.bf16.mxu0 0
        %478 = vmatpush1.bf16.xpose.msra.mxu0 0
        %479 = vmatprep.subr.bf16.mxu0 0
        %480 = vmatpush1.bf16.xpose.msra.mxu0 0
        %481 = vmatprep.subr.bf16.mxu0 0
        %482 = vmatpush1.bf16.xpose.msra.mxu0 0
        %483 = vmatprep.subr.bf16.mxu0 0
        %484 = vmatpush1.bf16.xpose.msra.mxu0 0
        %485 = vmatprep.subr.bf16.mxu0 0
        %486 = vmatpush1.bf16.xpose.msra.mxu0 0
        %487 = vmatprep.subr.bf16.mxu0 0
        %488 = vmatpush1.bf16.xpose.msra.mxu0 0
        %489 = vmatprep.subr.bf16.mxu0 0
        %490 = vmatpush1.bf16.xpose.msra.mxu0 0
        %491 = vmatprep.mubr.bf16.mxu0 0
        %492 = vmatmul.mubr.bf16.gmra.mrb[0].mxu0 %v457
        %v493 = vpop.f32.mrb[0].mxu0
        %v494 = vadd.f32 0.0, %v493
        %v495 = vpop.f32.mrb[0].mxu0
        %v496 = vpop.f32.mrb[0].mxu0
        %v497 = vpop.f32.mrb[0].mxu0
        %498 = vdwg.mxu0
        %v499 = vsel %vm385, %v494, -inf
        %500 = vmax.xlane.f32.xlu0 %v499
        %v501 = vpop.xlane.xlu0 %500
        %v502 = vsub.f32 %v494, %v501
        %v503 = vmul.f32 %v502, 1.442695
        %v504 = vpow.pop %v503
        %v505 = vsel %vm385, %v504, 0.0
        %506 = vadd.xlane.f32.xlu0 %v505
        %v507 = vpop.xlane.xlu0 %506
        %v508 = vrcp.pop %v507
        %v509 = vmul.f32 %v504, %v508
        %v510 = vpack.c.bf16 %v509, %v509
        %v511 = vpack.c.bf16 %v324, %v324
        %v513 = vsel %vm385, %v510, 0
        %v516 = vsel %vm402, %v511, 0
        %518 = vmatprep.subr.bf16.mxu0 0
        %519 = vmatpush1.bf16.msra.mxu0 %v516
        %520 = vmatprep.subr.bf16.mxu0 0
        %521 = vmatpush1.bf16.msra.mxu0 0
        %522 = vmatprep.subr.bf16.mxu0 0
        %523 = vmatpush1.bf16.msra.mxu0 0
        %524 = vmatprep.subr.bf16.mxu0 0
        %525 = vmatpush1.bf16.msra.mxu0 0
        %526 = vmatprep.subr.bf16.mxu0 0
        %527 = vmatpush1.bf16.msra.mxu0 0
        %528 = vmatprep.subr.bf16.mxu0 0
        %529 = vmatpush1.bf16.msra.mxu0 0
        %530 = vmatprep.subr.bf16.mxu0 0
        %531 = vmatpush1.bf16.msra.mxu0 0
        %532 = vmatprep.subr.bf16.mxu0 0
        %533 = vmatpush1.bf16.msra.mxu0 0
        %534 = vmatprep.subr.bf16.mxu0 0
        %535 = vmatpush1.bf16.msra.mxu0 0
        %536 = vmatprep.subr.bf16.mxu0 0
        %537 = vmatpush1.bf16.msra.mxu0 0
        %538 = vmatprep.subr.bf16.mxu0 0
        %539 = vmatpush1.bf16.msra.mxu0 0
        %540 = vmatprep.subr.bf16.mxu0 0
        %541 = vmatpush1.bf16.msra.mxu0 0
        %542 = vmatprep.subr.bf16.mxu0 0
        %543 = vmatpush1.bf16.msra.mxu0 0
        %544 = vmatprep.subr.bf16.mxu0 0
        %545 = vmatpush1.bf16.msra.mxu0 0
        %546 = vmatprep.subr.bf16.mxu0 0
        %547 = vmatpush1.bf16.msra.mxu0 0
        %548 = vmatprep.subr.bf16.mxu0 0
        %549 = vmatpush1.bf16.msra.mxu0 0
        %550 = vmatprep.mubr.bf16.mxu0 0
        %551 = vmatmul.mubr.bf16.gmra.mrb[0].mxu0 %v513
        %v552 = vpop.f32.mrb[0].mxu0
        %v553 = vadd.f32 0.0, %v552
        %v554 = vpop.f32.mrb[0].mxu0
        %v555 = vpop.f32.mrb[0].mxu0
        %v556 = vpop.f32.mrb[0].mxu0
        %557 = vdwg.mxu0
        %558 = vst [vmem:[#allocation3 + $0x8] sm:$0xff] %v553
        %v559 = vld [vmem:[#allocation3] sm:$0xff]
        %v560 = vld [vmem:[#allocation3 + $0x8] sm:$0xff]
        %v561 = vpack.c.bf16 %v559, %v559
        %v562 = vpack.c.bf16 %v560, %v560
        %v563 = vld [vmem:[%s3] sm:$0xf]
        %v564 = vld [vmem:[%s3 + $0x4] sm:$0xf]
        %v565 = vld [vmem:[%s3 + $0x8] sm:$0xf]
        %v566 = vld [vmem:[%s3 + $0xc] sm:$0xf]
        %v567 = vld [vmem:[%s3 + $0x10] sm:$0xf]
        %v568 = vld [vmem:[%s3 + $0x14] sm:$0xf]
        %v569 = vld [vmem:[%s3 + $0x18] sm:$0xf]
        %v570 = vld [vmem:[%s3 + $0x1c] sm:$0xf]
        %v571 = vld [vmem:[%s3 + $0x20] sm:$0xf]
        %v572 = vld [vmem:[%s3 + $0x24] sm:$0xf]
        %v573 = vld [vmem:[%s3 + $0x28] sm:$0xf]
        %v574 = vld [vmem:[%s3 + $0x2c] sm:$0xf]
        %v575 = vld [vmem:[%s3 + $0x30] sm:$0xf]
        %v576 = vld [vmem:[%s3 + $0x34] sm:$0xf]
        %v577 = vld [vmem:[%s3 + $0x38] sm:$0xf]
        %v578 = vld [vmem:[%s3 + $0x3c] sm:$0xf]
        %v579 = vld [vmem:[%s3 + $0x40] sm:$0xf]
        %v580 = vld [vmem:[%s3 + $0x44] sm:$0xf]
        %v581 = vld [vmem:[%s3 + $0x48] sm:$0xf]
        %v582 = vld [vmem:[%s3 + $0x4c] sm:$0xf]
        %v583 = vld [vmem:[%s3 + $0x50] sm:$0xf]
        %v584 = vld [vmem:[%s3 + $0x54] sm:$0xf]
        %v585 = vld [vmem:[%s3 + $0x58] sm:$0xf]
        %v586 = vld [vmem:[%s3 + $0x5c] sm:$0xf]
        %v587 = vld [vmem:[%s3 + $0x60] sm:$0xf]
        %v588 = vld [vmem:[%s3 + $0x64] sm:$0xf]
        %v589 = vld [vmem:[%s3 + $0x68] sm:$0xf]
        %v590 = vld [vmem:[%s3 + $0x6c] sm:$0xf]
        %v591 = vld [vmem:[%s3 + $0x70] sm:$0xf]
        %v592 = vld [vmem:[%s3 + $0x74] sm:$0xf]
        %v593 = vld [vmem:[%s3 + $0x78] sm:$0xf]
        %v594 = vld [vmem:[%s3 + $0x7c] sm:$0xf]
        %v595 = vld [vmem:[%s4] sm:$0x1]
        %v597 = vlaneseq
        %v598 = vshrl.u32 %v597, 7
        %v599 = vsub.s32 0, %v598
        %v600 = vrot.slane %v595, %v599
        %v634 = vunpack.c.l.b16 %v563
        %v635 = vunpack.c.l.b16 %v564
        %v636 = vunpack.c.l.b16 %v565
        %v637 = vunpack.c.l.b16 %v566
        %v638 = vunpack.c.l.b16 %v567
        %v639 = vunpack.c.l.b16 %v568
        %v640 = vunpack.c.l.b16 %v569
        %v641 = vunpack.c.l.b16 %v570
        %v642 = vunpack.c.l.b16 %v571
        %v643 = vunpack.c.l.b16 %v572
        %v644 = vunpack.c.l.b16 %v573
        %v645 = vunpack.c.l.b16 %v574
        %v646 = vunpack.c.l.b16 %v575
        %v647 = vunpack.c.l.b16 %v576
        %v648 = vunpack.c.l.b16 %v577
        %v649 = vunpack.c.l.b16 %v578
        %v650 = vunpack.c.l.b16 %v579
        %v651 = vunpack.c.l.b16 %v580
        %v652 = vunpack.c.l.b16 %v581
        %v653 = vunpack.c.l.b16 %v582
        %v654 = vunpack.c.l.b16 %v583
        %v655 = vunpack.c.l.b16 %v584
        %v656 = vunpack.c.l.b16 %v585
        %v657 = vunpack.c.l.b16 %v586
        %v658 = vunpack.c.l.b16 %v587
        %v659 = vunpack.c.l.b16 %v588
        %v660 = vunpack.c.l.b16 %v589
        %v661 = vunpack.c.l.b16 %v590
        %v662 = vunpack.c.l.b16 %v591
        %v663 = vunpack.c.l.b16 %v592
        %v664 = vunpack.c.l.b16 %v593
        %v665 = vunpack.c.l.b16 %v594
        %v666 = vpack.c.b16 %v635, %v634
        %v667 = vpack.c.b16 %v637, %v636
        %v668 = vpack.c.b16 %v639, %v638
        %v669 = vpack.c.b16 %v641, %v640
        %v670 = vpack.c.b16 %v643, %v642
        %v671 = vpack.c.b16 %v645, %v644
        %v672 = vpack.c.b16 %v647, %v646
        %v673 = vpack.c.b16 %v649, %v648
        %v674 = vpack.c.b16 %v651, %v650
        %v675 = vpack.c.b16 %v653, %v652
        %v676 = vpack.c.b16 %v655, %v654
        %v677 = vpack.c.b16 %v657, %v656
        %v678 = vpack.c.b16 %v659, %v658
        %v679 = vpack.c.b16 %v661, %v660
        %v680 = vpack.c.b16 %v663, %v662
        %v681 = vpack.c.b16 %v665, %v664
        %698 = vmatprep.subr.bf16.mxu0 0
        %699 = vmatpush1.bf16.msra.mxu0 %v666
        %700 = vmatprep.subr.bf16.mxu0 0
        %701 = vmatpush1.bf16.msra.mxu0 %v667
        %702 = vmatprep.subr.bf16.mxu0 0
        %703 = vmatpush1.bf16.msra.mxu0 %v668
        %704 = vmatprep.subr.bf16.mxu0 0
        %705 = vmatpush1.bf16.msra.mxu0 %v669
        %706 = vmatprep.subr.bf16.mxu0 0
        %707 = vmatpush1.bf16.msra.mxu0 %v670
        %708 = vmatprep.subr.bf16.mxu0 0
        %709 = vmatpush1.bf16.msra.mxu0 %v671
        %710 = vmatprep.subr.bf16.mxu0 0
        %711 = vmatpush1.bf16.msra.mxu0 %v672
        %712 = vmatprep.subr.bf16.mxu0 0
        %713 = vmatpush1.bf16.msra.mxu0 %v673
        %714 = vmatprep.subr.bf16.mxu0 0
        %715 = vmatpush1.bf16.msra.mxu0 %v674
        %716 = vmatprep.subr.bf16.mxu0 0
        %717 = vmatpush1.bf16.msra.mxu0 %v675
        %718 = vmatprep.subr.bf16.mxu0 0
        %719 = vmatpush1.bf16.msra.mxu0 %v676
        %720 = vmatprep.subr.bf16.mxu0 0
        %721 = vmatpush1.bf16.msra.mxu0 %v677
        %722 = vmatprep.subr.bf16.mxu0 0
        %723 = vmatpush1.bf16.msra.mxu0 %v678
        %724 = vmatprep.subr.bf16.mxu0 0
        %725 = vmatpush1.bf16.msra.mxu0 %v679
        %726 = vmatprep.subr.bf16.mxu0 0
        %727 = vmatpush1.bf16.msra.mxu0 %v680
        %728 = vmatprep.subr.bf16.mxu0 0
        %729 = vmatpush1.bf16.msra.mxu0 %v681
        %730 = vmatprep.mubr.bf16.mxu0 %v562
        %731 = vmatmul.mubr.bf16.gmra.mrb[0].mxu0 %v561
        %v732 = vpop.f32.mrb[0].mxu0
        %v733 = vadd.f32 %v600, %v732
        %v734 = vpop.f32.mrb[0].mxu0
        %v735 = vpop.f32.mrb[0].mxu0
        %v736 = vpop.f32.mrb[0].mxu0
        %737 = vdwg.mxu0
        %vm738 = vcmask 261120
        %739 = vst.msk [vmem:[%s229] sm:$0xff] %vm738, %v733
        %s740 = sand.u32 %s151, 1
        %s741 = scalar_lea.sflag [#allocation5], %s740
        %s742 = sand.u32 %s151, 1
        %s743 = smul.addr %s742, 8
        %s744 = scalar_lea.vmem [#allocation4], %s743
        // Predicated region
        $region45: #{tpu_custom_call.1} parent=39 // pred_check
          %p745 = pneg %p161
        $region46: #{tpu_custom_call.1} parent=39 // pred_check_branch
          %747 = sbr.rel (%p745) target = $region48
        $region47: #{tpu_custom_call.1} parent=39 // pred_region
          %s749 = ssub.s32 128, 128
          %750 = vsyncadd %s741, %s749
          %s751 = sadd.s32 %s24, %s23
          %s752 = smul.addr %s751, 128
          %s753 = scalar_lea.hbm %s5, %s752
          %s755 = sshll.u32 %s744, 4
          %s756 = int_to_ptr.vmem [resolvable:$true] %s755
          %758 = dma.vmem_to_hbm [thread:$0]  %s756, 128, %s753, %s741
        $region48: #{tpu_custom_call.1} parent=39 // pred_fallthru
          _
      $region40: #{tpu_custom_call.1} parent=5 // pred_fallthru
        _
      %p759 = scmp.le.s32.totalorder 2, %s14
      // Predicated region
      $region49: #{tpu_custom_call.1} parent=5 // pred_check
        %p760 = pneg %p759
      $region50: #{tpu_custom_call.1} parent=5 // pred_check_branch
        %762 = sbr.rel (%p760) target = $region52
      $region51: #{tpu_custom_call.1} parent=5 // pred_region
        %s763 = ssub.s32 %s14, 2
        // Predicated region
        $region53: #{tpu_custom_call.1} parent=51 // pred_check
          %p764 = pneg %p167
        $region54: #{tpu_custom_call.1} parent=51 // pred_check_branch
          %766 = sbr.rel (%p764) target = $region56
        $region55: #{tpu_custom_call.1} parent=51 // pred_region
          %s767 = sand.u32 %s152, 1
          %s768 = scalar_lea.sflag [#allocation5], %s767
          %s769 = sand.u32 %s152, 1
          %s770 = smul.addr %s769, 8
          %s771 = scalar_lea.vmem [#allocation4], %s770
          %772 = dma.done %s768, 128
        $region56: #{tpu_custom_call.1} parent=51 // pred_fallthru
          _
      $region52: #{tpu_custom_call.1} parent=5 // pred_fallthru
        _
    $region6: #{tpu_custom_call.1} parent=1 // loop_footer
      %s18 = sadd.s32 1, %s14
    $region7: #{tpu_custom_call.1} parent=1 // loop_footer_branch
      %13 = sbr.rel target = $region3
    $region8: #{tpu_custom_call.1} parent=1 // loop_exit
      _
    %773 = vsyncpa [#allocation5], 1
    %s774 = scalar_lea.sflag [#allocation5], 1
    %775 = vsyncpa %s774, 1

</llo_original>
